<compile_context>
chip_gen: v7x
topology: tpu7x:2x2x1
jax: 0.10.0
libtpu: 0.0.40
codegen_flags: <defaults>
</compile_context>

<pallas_src>
import jax
import jax.numpy as jnp
import numpy as np
from jax.experimental import pallas as pl
from jax.experimental.pallas import tpu as pltpu


def cup_kernel(x_ref, w_ref, b_ref, o_ref):
    # x_ref: (1, H, W, F)        one input image (compute dtype)
    # w_ref: (2, 4, F, 2F)       fused weights [row parity a, shift, in ch, (b, f)]
    # b_ref: (1, 2F)             fused bias (f32), identical for every parity
    # o_ref: (1, H-1, 1, W-1, 2F) output rows of parity a = program_id(1)
    _, H, W, F = x_ref.shape
    hm1, wm1 = H - 1, W - 1
    two_f = 2 * F
    a = pl.program_id(1)                       # output row parity for this step

    # Flatten (H, W) onto the sublane axis.  With W % 8 == 0 this is a layout
    # no-op (no relayout copy).  Pad one zero row so every shifted window
    # below stays in-bounds.
    xflat = x_ref[0].reshape(H * W, F)
    xflat = jnp.concatenate([xflat, jnp.zeros((1, F), xflat.dtype)], axis=0)

    # out[p, q, (b,f)] = sum_{di,dj} x[p+di, q+dj, :] @ W_a[di,dj] + bias
    # Flat-index trick: for flat output row t = p*W + q, the (di,dj) source row
    # is t + di*W + dj, so each shift is ONE contiguous 2-D slice -> one MXU
    # matmul.  (The q = W-1 column is wrap-around garbage and is dropped below.)
    m = hm1 * W
    acc = None
    for s, (di, dj) in enumerate(((0, 0), (0, 1), (1, 0), (1, 1))):
        off = di * W + dj
        part = jnp.dot(xflat[off:off + m, :], w_ref[a, s],
                       preferred_element_type=jnp.float32)
        acc = part if acc is None else acc + part

    acc = acc + b_ref[...]                          # f32 bias add
    y = acc.reshape(hm1, W, two_f)[:, :wm1, :]      # drop wrap-around column
    o_ref[...] = y.reshape(1, hm1, 1, wm1, two_f).astype(o_ref.dtype)


def _fuse_weights(wt, bt, wc, bc):
    """Fold ConvTranspose2d + PixelShuffle + Conv2d into per-shift matmul weights.

    wt: (F, F//4, 2, 2) ConvTranspose2d weight, bt: (F//4,)
    wc: (F, F//4, 3, 3) Conv2d weight,          bc: (F,)
    Returns
      w_all: (2, 4, F, 2F) f32 -- [row parity a, shift di*2+dj, in ch, (b, f)]
      b_all: (1, 2F)       f32 -- fused bias (same for every parity)
    """
    wt = np.asarray(wt, np.float32)
    bt = np.asarray(bt, np.float32)
    wc = np.asarray(wc, np.float32)
    bc = np.asarray(bc, np.float32)
    F, cout = wt.shape[0], wt.shape[1]

    # Deconv taps with the pixel-shuffle identity folded in:
    #   (x_c + x_s)[n, o, 2h+r, 2w+s] = sum_i x[n,i,h,w] * w_eff[2r+s][i,o] + bt[o]
    w_eff = np.stack([wt[:, :, r, s] for r in range(2) for s in range(2)], 0)
    for off in range(4):
        for co in range(cout):
            w_eff[off, 4 * co + off, co] += 1.0                  # (4, F, cout)

    wc_mat = np.transpose(wc, (2, 3, 1, 0))                      # (3, 3, cout, F)

    # Fuse both stages:
    #   out[n, 2p+a, 2q+b, f] = sum_{di,dj} x[n, p+di, q+dj, :] @ Wcomb[a,b,di,dj][:, f]
    w_all = np.zeros((2, 4, F, 2 * F), np.float32)
    for a in range(2):
        for b in range(2):
            for dh in range(3):
                for dw in range(3):
                    di, rh = divmod(a + dh, 2)
                    dj, rw = divmod(b + dw, 2)
                    w_all[a, di * 2 + dj, :, b * F:(b + 1) * F] += (
                        w_eff[rh * 2 + rw] @ wc_mat[dh, dw])

    # The deconv bias passes linearly through the 3x3 conv -> one final bias.
    b_final = bc + np.einsum('ockl,c->o', wc, bt)
    b_all = np.tile(b_final, 2).reshape(1, 2 * F)
    return w_all, b_all


def cup_forward(x_nhwc, wt, bt, wc, bc, *, compute_dtype=jnp.bfloat16,
                out_dtype=None, input_buffer_count=2):
    """x_nhwc: (N, H, W, F).  Returns NHWC output (N, 2H-2, 2W-2, F).

    compute_dtype=jnp.bfloat16 (default) is the recommended mem-bound setting
    on v6e/v7x; pass jnp.float32 for a bit-accurate check.  W % 8 == 0 keeps
    the in-kernel (H, W) flatten / unflatten a layout no-op.
    """
    N, H, W, F = x_nhwc.shape
    assert F % 4 == 0, "features must be divisible by 4"
    hm1, wm1 = H - 1, W - 1
    out_dtype = compute_dtype if out_dtype is None else out_dtype

    w_all, b_all = _fuse_weights(wt, bt, wc, bc)
    x_in = x_nhwc.astype(compute_dtype)
    w_in = jnp.asarray(w_all).astype(compute_dtype)
    b_in = jnp.asarray(b_all)                       # stays float32

    x_spec_kw = {}
    if input_buffer_count != 2:                     # v5e knob: deeper input prefetch
        x_spec_kw["pipeline_mode"] = pl.Buffered(input_buffer_count)

    out = pl.pallas_call(
        cup_kernel,
        out_shape=jax.ShapeDtypeStruct((N, hm1, 2, wm1, 2 * F), out_dtype),
        grid_spec=pltpu.PrefetchScalarGridSpec(
            num_scalar_prefetch=0,
            grid=(N, 2),                            # (batch, output row parity a)
            in_specs=[
                pl.BlockSpec((1, H, W, F), lambda n, a: (n, 0, 0, 0), **x_spec_kw),
                pl.BlockSpec((2, 4, F, 2 * F), lambda n, a: (0, 0, 0, 0)),
                pl.BlockSpec((1, 2 * F), lambda n, a: (0, 0)),
            ],
            out_specs=pl.BlockSpec((1, hm1, 1, wm1, 2 * F),
                                   lambda n, a: (n, 0, a, 0, 0)),
        ),
        compiler_params=pltpu.CompilerParams(
            dimension_semantics=("parallel", "arbitrary")),
    )(x_in, w_in, b_in)

    # Dims are already ordered (n, p, a, q, b, f) -> one pure row-major reshape.
    return out.reshape(N, 2 * hm1, 2 * wm1, F)


def ref_forward(x_nchw, wt, bt, wc, bc):
    """Pure-JAX reference matching the PyTorch module semantics (NCHW)."""
    N, F, H, W = x_nchw.shape
    cout = F // 4
    # ConvTranspose2d(k=2, s=2)
    xc = jnp.einsum('nihw,iokl->nohkwl', x_nchw, wt).reshape(N, cout, 2 * H, 2 * W)
    xc = xc + bt[None, :, None, None]
    # PixelShuffle(2)
    xs = x_nchw.reshape(N, cout, 2, 2, H, W).transpose(0, 1, 4, 2, 5, 3)
    xs = xs.reshape(N, cout, 2 * H, 2 * W)
    y = xc + xs
    out = jax.lax.conv_general_dilated(
        y, wc, window_strides=(1, 1), padding='VALID',
        dimension_numbers=('NCHW', 'OIHW', 'NCHW'))
    return out + bc[None, :, None, None]


if __name__ == "__main__":
    key = jax.random.PRNGKey(0)
    N, F, H, W = 8, 16, 16, 16          # features=16 -> out_features=4
    cout = F // 4
    k1, k2, k3, k4, k5 = jax.random.split(key, 5)

    x_nchw = jax.random.normal(k1, (N, F, H, W), jnp.float32)
    wt = jax.random.normal(k2, (F, cout, 2, 2), jnp.float32) * 0.1   # ConvTranspose2d weight
    bt = jax.random.normal(k3, (cout,), jnp.float32) * 0.1           # ConvTranspose2d bias
    wc = jax.random.normal(k4, (F, cout, 3, 3), jnp.float32) * 0.1   # Conv2d weight
    bc = jax.random.normal(k5, (F,), jnp.float32) * 0.1              # Conv2d bias

    # Kernel works NHWC end-to-end; the NCHW<->NHWC glue lives only at the
    # test boundary (a surrounding model would stay NHWC).
    x_nhwc = jnp.transpose(x_nchw, (0, 2, 3, 1))
    ref = ref_forward(x_nchw, wt, bt, wc, bc)

    # 1) f32 path: checks the fused-weight algebra exactly.
    out_f32 = cup_forward(x_nhwc, wt, bt, wc, bc, compute_dtype=jnp.float32)
    out_f32 = jax.block_until_ready(out_f32)
    assert out_f32.shape == (N, 2 * H - 2, 2 * W - 2, F), out_f32.shape
    np.testing.assert_allclose(
        np.asarray(jnp.transpose(out_f32, (0, 3, 1, 2))), np.asarray(ref),
        atol=5e-4, rtol=5e-4)

    # 2) bf16 I/O path (the performance default on v6e/v7x): loose tolerance
    #    since inputs, weights, matmul operands and the stored output are bf16.
    out_bf16 = cup_forward(x_nhwc, wt, bt, wc, bc)
    out_bf16 = jax.block_until_ready(out_bf16)
    np.testing.assert_allclose(
        np.asarray(jnp.transpose(out_bf16.astype(jnp.float32), (0, 3, 1, 2))),
        np.asarray(ref), atol=5e-2, rtol=5e-2)

    print("KERNEL_OK")
</pallas_src>

<mosaic_0001>
module attributes {stable_mosaic.version = 11 : i64} {
  func.func @cup_kernel(%arg0: i32, %arg1: i32, %arg2: memref<1x16x16x16xf32, #tpu.memory_space<vmem>>, %arg3: memref<2x4x16x32xf32, #tpu.memory_space<vmem>>, %arg4: memref<1x32xf32, #tpu.memory_space<vmem>>, %arg5: memref<1x15x1x15x32xf32, #tpu.memory_space<vmem>>) attributes {dimension_semantics = [#tpu.dimension_semantics<parallel>, #tpu.dimension_semantics<arbitrary>], iteration_bounds = array<i64: 8, 2>, scalar_prefetch = 0 : i64, scratch_operands = 0 : i64, tpu.core_type = #tpu.core_type<tc>, window_params = [{transform_indices = @transform_0, window_bounds = array<i64: 1, 16, 16, 16>}, {pipeline_mode = #tpu.pipeline_mode<synchronous>, transform_indices = @transform_1, window_bounds = array<i64: 2, 4, 16, 32>}, {pipeline_mode = #tpu.pipeline_mode<synchronous>, transform_indices = @transform_2, window_bounds = array<i64: 1, 32>}, {transform_indices = @transform_3, window_bounds = array<i64: 1, 15, 1, 15, 32>}]} {
    %c0 = arith.constant 0 : index
    %c0_0 = arith.constant 0 : index
    %c0_1 = arith.constant 0 : index
    %c0_2 = arith.constant 0 : index
    %0 = vector.load %arg2[%c0, %c0_0, %c0_1, %c0_2] : memref<1x16x16x16xf32, #tpu.memory_space<vmem>>, vector<1x16x16x16xf32>
    %1 = vector.shape_cast %0 : vector<1x16x16x16xf32> to vector<16x16x16xf32>
    %2 = vector.shape_cast %1 : vector<16x16x16xf32> to vector<256x16xf32>
    %cst = arith.constant 0.000000e+00 : f32
    %3 = vector.broadcast %cst : f32 to vector<1x16xf32>
    %4 = tpu.concatenate %2, %3 in 0 : vector<256x16xf32>, vector<1x16xf32> -> vector<257x16xf32>
    %5 = vector.extract_strided_slice %4 {offsets = [0, 0], sizes = [240, 16], strides = [1, 1]} : vector<257x16xf32> to vector<240x16xf32>
    %6 = arith.index_cast %arg1 : i32 to index
    %c0_3 = arith.constant 0 : index
    %c0_4 = arith.constant 0 : index
    %c0_5 = arith.constant 0 : index
    %7 = vector.load %arg3[%6, %c0_3, %c0_4, %c0_5] : memref<2x4x16x32xf32, #tpu.memory_space<vmem>>, vector<1x1x16x32xf32>
    %8 = vector.shape_cast %7 : vector<1x1x16x32xf32> to vector<16x32xf32>
    %cst_6 = arith.constant dense<0.000000e+00> : vector<240x32xf32>
    %9 = tpu.matmul %5, %8, %cst_6 {dimension_numbers = #tpu.dot_dimension_numbers<[1], [0], [0], [1], [0, 0, 1, 1], [], []>} : vector<240x16xf32>, vector<16x32xf32>, vector<240x32xf32> -> vector<240x32xf32>
    %10 = vector.extract_strided_slice %4 {offsets = [1, 0], sizes = [240, 16], strides = [1, 1]} : vector<257x16xf32> to vector<240x16xf32>
    %11 = arith.index_cast %arg1 : i32 to index
    %c1 = arith.constant 1 : index
    %c0_7 = arith.constant 0 : index
    %c0_8 = arith.constant 0 : index
    %12 = vector.load %arg3[%11, %c1, %c0_7, %c0_8] : memref<2x4x16x32xf32, #tpu.memory_space<vmem>>, vector<1x1x16x32xf32>
    %13 = vector.shape_cast %12 : vector<1x1x16x32xf32> to vector<16x32xf32>
    %cst_9 = arith.constant dense<0.000000e+00> : vector<240x32xf32>
    %14 = tpu.matmul %10, %13, %cst_9 {dimension_numbers = #tpu.dot_dimension_numbers<[1], [0], [0], [1], [0, 0, 1, 1], [], []>} : vector<240x16xf32>, vector<16x32xf32>, vector<240x32xf32> -> vector<240x32xf32>
    %15 = arith.addf %9, %14 : vector<240x32xf32>
    %16 = vector.extract_strided_slice %4 {offsets = [16, 0], sizes = [240, 16], strides = [1, 1]} : vector<257x16xf32> to vector<240x16xf32>
    %17 = arith.index_cast %arg1 : i32 to index
    %c2 = arith.constant 2 : index
    %c0_10 = arith.constant 0 : index
    %c0_11 = arith.constant 0 : index
    %18 = vector.load %arg3[%17, %c2, %c0_10, %c0_11] : memref<2x4x16x32xf32, #tpu.memory_space<vmem>>, vector<1x1x16x32xf32>
    %19 = vector.shape_cast %18 : vector<1x1x16x32xf32> to vector<16x32xf32>
    %cst_12 = arith.constant dense<0.000000e+00> : vector<240x32xf32>
    %20 = tpu.matmul %16, %19, %cst_12 {dimension_numbers = #tpu.dot_dimension_numbers<[1], [0], [0], [1], [0, 0, 1, 1], [], []>} : vector<240x16xf32>, vector<16x32xf32>, vector<240x32xf32> -> vector<240x32xf32>
    %21 = arith.addf %15, %20 : vector<240x32xf32>
    %22 = vector.extract_strided_slice %4 {offsets = [17, 0], sizes = [240, 16], strides = [1, 1]} : vector<257x16xf32> to vector<240x16xf32>
    %23 = arith.index_cast %arg1 : i32 to index
    %c3 = arith.constant 3 : index
    %c0_13 = arith.constant 0 : index
    %c0_14 = arith.constant 0 : index
    %24 = vector.load %arg3[%23, %c3, %c0_13, %c0_14] : memref<2x4x16x32xf32, #tpu.memory_space<vmem>>, vector<1x1x16x32xf32>
    %25 = vector.shape_cast %24 : vector<1x1x16x32xf32> to vector<16x32xf32>
    %cst_15 = arith.constant dense<0.000000e+00> : vector<240x32xf32>
    %26 = tpu.matmul %22, %25, %cst_15 {dimension_numbers = #tpu.dot_dimension_numbers<[1], [0], [0], [1], [0, 0, 1, 1], [], []>} : vector<240x16xf32>, vector<16x32xf32>, vector<240x32xf32> -> vector<240x32xf32>
    %27 = arith.addf %21, %26 : vector<240x32xf32>
    %c0_16 = arith.constant 0 : index
    %c0_17 = arith.constant 0 : index
    %28 = vector.load %arg4[%c0_16, %c0_17] : memref<1x32xf32, #tpu.memory_space<vmem>>, vector<1x32xf32>
    %29 = vector.broadcast %28 : vector<1x32xf32> to vector<240x32xf32>
    %30 = arith.addf %27, %29 : vector<240x32xf32>
    %31 = vector.shape_cast %30 : vector<240x32xf32> to vector<15x16x32xf32>
    %32 = vector.extract_strided_slice %31 {offsets = [0, 0, 0], sizes = [15, 15, 32], strides = [1, 1, 1]} : vector<15x16x32xf32> to vector<15x15x32xf32>
    %33 = vector.shape_cast %32 : vector<15x15x32xf32> to vector<1x15x1x15x32xf32>
    %c0_18 = arith.constant 0 : index
    %c0_19 = arith.constant 0 : index
    %c0_20 = arith.constant 0 : index
    %c0_21 = arith.constant 0 : index
    %c0_22 = arith.constant 0 : index
    %34 = vector.load %arg5[%c0_18, %c0_19, %c0_20, %c0_21, %c0_22] : memref<1x15x1x15x32xf32, #tpu.memory_space<vmem>>, vector<1x15x1x15x32xf32>
    tpu.vector_store %arg5[%c0_18, %c0_19, %c0_20, %c0_21, %c0_22], %33 {strides = array<i32>} : memref<1x15x1x15x32xf32, #tpu.memory_space<vmem>>, vector<1x15x1x15x32xf32>,
    return
  }
  func.func @transform_0(%arg0: i32, %arg1: i32) -> (i32, i32, i32, i32) {
    %c0_i32 = arith.constant 0 : i32
    %c0_i32_0 = arith.constant 0 : i32
    %c0_i32_1 = arith.constant 0 : i32
    %c0_i32_2 = arith.constant 0 : i32
    return %arg0, %c0_i32, %c0_i32_0, %c0_i32_1 : i32, i32, i32, i32
  }
  func.func @transform_1(%arg0: i32, %arg1: i32) -> (i32, i32, i32, i32) {
    %c0_i32 = arith.constant 0 : i32
    %c0_i32_0 = arith.constant 0 : i32
    %c0_i32_1 = arith.constant 0 : i32
    %c0_i32_2 = arith.constant 0 : i32
    %c0_i32_3 = arith.constant 0 : i32
    return %c0_i32, %c0_i32_0, %c0_i32_1, %c0_i32_2 : i32, i32, i32, i32
  }
  func.func @transform_2(%arg0: i32, %arg1: i32) -> (i32, i32) {
    %c0_i32 = arith.constant 0 : i32
    %c0_i32_0 = arith.constant 0 : i32
    %c0_i32_1 = arith.constant 0 : i32
    return %c0_i32, %c0_i32_0 : i32, i32
  }
  func.func @transform_3(%arg0: i32, %arg1: i32) -> (i32, i32, i32, i32, i32) {
    %c0_i32 = arith.constant 0 : i32
    %c0_i32_0 = arith.constant 0 : i32
    %c0_i32_1 = arith.constant 0 : i32
    %c0_i32_2 = arith.constant 0 : i32
    return %arg0, %c0_i32, %arg1, %c0_i32_0, %c0_i32_1 : i32, i32, i32, i32, i32
  }
}

</mosaic_0001>

<llo_original>
// kernel: tpu_custom_call.1
$region0: #{tpu_custom_call.1}
  #allocation0 [shape = 'u32[]', space=smem, size = 0x4, offset = 0x4, fixed_abs, tag = 'smem constant byte address 0x4 - core index']
  #allocation1 [shape = 'u32[144,128]{1,0:T(1,128)}', space=vmem, size = 0x12000, scoped, tag = 'internal scratch']
  %s0 = inlined_call_operand.hbm [shape: f32[8,16,16,16], index: 0, kind: input, shape index: {}]
  %s1 = inlined_call_operand.hbm [shape: f32[2,4,16,32], index: 1, kind: input, shape index: {}]
  %s2 = inlined_call_operand.hbm [shape: f32[1,32], index: 2, kind: input, shape index: {}]
  %s3 = inlined_call_operand.vmem [shape: f32[8,15,2,15,32], index: 3, kind: output, shape index: {}]
  %s4 = sld [smem:[#allocation0]]
  $region91: #{tpu_custom_call.1} parent=0
    _
  %s6 = ssub.s32 1, %s4
  %s7 = scalar_select 0, %s6, %s4
  $region1: #{tpu_custom_call.1} parent=0
    #allocation2 [shape = 'u8[262144]{0}', space=vmem, size = 0x40000, scoped, tag = 'input window, operand 0']
    #allocation3 [shape = 's32[2]{0}', space=sflag, size = 0x8, scoped, tag = 'scoped memory for tpu_custom_call.1']
    #allocation4 [shape = 'u8[65536]{0}', space=vmem, size = 0x10000, scoped, tag = 'input window, operand 1, single buffered']
    #allocation5 [shape = 's32[1]{0}', space=sflag, size = 0x4, scoped, tag = 'scoped memory for tpu_custom_call.1']
    #allocation6 [shape = 'u8[512]{0}', space=vmem, size = 0x400, scoped, tag = 'input window, operand 2, single buffered']
    #allocation7 [shape = 'u8[245760]{0}', space=vmem, size = 0x3c000, scoped, tag = 'output window, operand 0']
    %8 = vsyncpa [#allocation3], 0
    %s9 = scalar_lea.sflag [#allocation3], 1
    %10 = vsyncpa %s9, 0
    %11 = vsyncpa [#allocation5], 0
    loop: start=0, step=1, limit=18
    $region2: #{tpu_custom_call.1} parent=1 // loop_pre_header
      _
    $region3: #{tpu_custom_call.1} parent=1 // loop_header
      %s13 = sphi 0, %s17
      %p14 = scmp.ge.s32.totalorder %s13, 18
      %s20 = sphi 0, %s32
      %s21 = sphi 0, %s28
      %s22 = sphi 0, %s20
      %s23 = sphi 0, %s21
      %s24 = sphi 0, %s22
      %s25 = sphi 0, %s23
      %s35 = sphi 0, %s37
      %s38 = sphi 0, %s35
      %s39 = sphi 0, %s38
      %s55 = sphi 0, %s39
      %s59 = sphi 0, %s59
      %s61 = sphi 0, %s59
      %s62 = sphi 0, %s61
      %s76 = sphi 0, %s62
      %s80 = sphi 0, %s80
      %s82 = sphi 0, %s80
      %s83 = sphi 0, %s82
      %s97 = sphi 0, %s83
      %s105 = sphi 0, %s107
      %s108 = sphi 0, %s105
      %s109 = sphi 0, %s108
      %s125 = sphi 0, %s109
    $region4: #{tpu_custom_call.1} parent=1 // loop_header_branch
      %16 = sbr.rel (%p14) target = $region8
    $region5: #{tpu_custom_call.1} parent=1 // loop_body
      %s18 = ssub.s32 %s13, 1
      %s19 = ssub.s32 %s13, 2
      %s26 = sadd.s32 1, %s21
      %p27 = scmp.ge.s32.totalorder %s26, 2
      %s28 = scalar_select %p27, 0, %s26
      %s29 = sadd.s32 1, %s20
      %s30 = scalar_select %p27, %s29, %s20
      %p31 = scmp.ge.s32.totalorder %s30, 8
      %s32 = scalar_select %p31, 0, %s30
      %s33 = ssub.s32 %s20, %s32
      %p34 = scmp.eq.s32.totalorder %s33, 0
      %s36 = sadd.s32 %s35, 1
      %s37 = scalar_select %p34, %s35, %s36
      %p40 = pneg %p34
      %p41 = scmp.eq.s32.totalorder %s13, 15
      %p42 = por %p40, %p41
      %p43 = scmp.ne.s32.totalorder %s35, %s38
      %p44 = scmp.eq.s32.totalorder %s13, 0
      %p45 = por %p43, %p44
      %p46 = scmp.ne.s32.totalorder %s35, %s38
      %p47 = scmp.eq.s32.totalorder %s18, 15
      %p48 = por %p46, %p47
      %p49 = scmp.ne.s32.totalorder %s38, %s39
      %p50 = scmp.eq.s32.totalorder %s18, 0
      %p51 = por %p49, %p50
      %p52 = scmp.ne.s32.totalorder %s38, %s39
      %p53 = scmp.eq.s32.totalorder %s19, 15
      %p54 = por %p52, %p53
      %p56 = scmp.ne.s32.totalorder %s39, %s55
      %p57 = scmp.eq.s32.totalorder %s19, 0
      %p58 = por %p56, %p57
      %s60 = sadd.s32 %s59, 1
      %p63 = scmp.eq.s32.totalorder %s13, 15
      %p64 = scmp.ne.s32.totalorder %s59, %s61
      %p65 = scmp.eq.s32.totalorder %s13, 0
      %p66 = por %p64, %p65
      %p67 = scmp.ne.s32.totalorder %s59, %s61
      %p68 = scmp.eq.s32.totalorder %s18, 15
      %p69 = por %p67, %p68
      %p70 = scmp.ne.s32.totalorder %s61, %s62
      %p71 = scmp.eq.s32.totalorder %s18, 0
      %p72 = por %p70, %p71
      %p73 = scmp.ne.s32.totalorder %s61, %s62
      %p74 = scmp.eq.s32.totalorder %s19, 15
      %p75 = por %p73, %p74
      %p77 = scmp.ne.s32.totalorder %s62, %s76
      %p78 = scmp.eq.s32.totalorder %s19, 0
      %p79 = por %p77, %p78
      %s81 = sadd.s32 %s80, 1
      %p84 = scmp.eq.s32.totalorder %s13, 15
      %p85 = scmp.ne.s32.totalorder %s80, %s82
      %p86 = scmp.eq.s32.totalorder %s13, 0
      %p87 = por %p85, %p86
      %p88 = scmp.ne.s32.totalorder %s80, %s82
      %p89 = scmp.eq.s32.totalorder %s18, 15
      %p90 = por %p88, %p89
      %p91 = scmp.ne.s32.totalorder %s82, %s83
      %p92 = scmp.eq.s32.totalorder %s18, 0
      %p93 = por %p91, %p92
      %p94 = scmp.ne.s32.totalorder %s82, %s83
      %p95 = scmp.eq.s32.totalorder %s19, 15
      %p96 = por %p94, %p95
      %p98 = scmp.ne.s32.totalorder %s83, %s97
      %p99 = scmp.eq.s32.totalorder %s19, 0
      %p100 = por %p98, %p99
      %s101 = ssub.s32 %s20, %s32
      %s102 = ssub.s32 %s21, %s28
      %s103 = sor.u32 %s101, %s102
      %p104 = scmp.eq.s32.totalorder %s103, 0
      %s106 = sadd.s32 %s105, 1
      %s107 = scalar_select %p104, %s105, %s106
      %p110 = pneg %p104
      %p111 = scmp.eq.s32.totalorder %s13, 15
      %p112 = por %p110, %p111
      %p113 = scmp.ne.s32.totalorder %s105, %s108
      %p114 = scmp.eq.s32.totalorder %s13, 0
      %p115 = por %p113, %p114
      %p116 = scmp.ne.s32.totalorder %s105, %s108
      %p117 = scmp.eq.s32.totalorder %s18, 15
      %p118 = por %p116, %p117
      %p119 = scmp.ne.s32.totalorder %s108, %s109
      %p120 = scmp.eq.s32.totalorder %s18, 0
      %p121 = por %p119, %p120
      %p122 = scmp.ne.s32.totalorder %s108, %s109
      %p123 = scmp.eq.s32.totalorder %s19, 15
      %p124 = por %p122, %p123
      %p126 = scmp.ne.s32.totalorder %s109, %s125
      %p127 = scmp.eq.s32.totalorder %s19, 0
      %p128 = por %p126, %p127
      %p129 = scmp.le.s32.totalorder 1, %s13
      %p130 = scmp.lt.s32.totalorder %s13, 17
      %p131 = pnand %p129, %p130
      %p132 = pneg %p131
      // Predicated region
      $region9: #{tpu_custom_call.1} parent=5 // pred_check
        _
      $region10: #{tpu_custom_call.1} parent=5 // pred_check_branch
        %134 = sbr.rel (%p131) target = $region12
      $region11: #{tpu_custom_call.1} parent=5 // pred_region
        %s135 = ssub.s32 %s13, 1
        // Predicated region
        $region13: #{tpu_custom_call.1} parent=11 // pred_check
          %p136 = pneg %p72
        $region14: #{tpu_custom_call.1} parent=11 // pred_check_branch
          %138 = sbr.rel (%p136) target = $region16
        $region15: #{tpu_custom_call.1} parent=11 // pred_region
          %s140 = ssub.s32 2048, 2048
          %141 = vsyncadd [#allocation5], %s140
          %s142 = sshll.u32 [#allocation4], 4
          %s143 = int_to_ptr.vmem [resolvable:$true] %s142
          %148 = dma.hbm_to_vmem [thread:$0]  %s1, 2048, %s143, [#allocation5], 128, 128, 8
        $region16: #{tpu_custom_call.1} parent=11 // pred_fallthru
          _
        // Predicated region
        $region17: #{tpu_custom_call.1} parent=11 // pred_check
          %p149 = pneg %p93
        $region18: #{tpu_custom_call.1} parent=11 // pred_check_branch
          %151 = sbr.rel (%p149) target = $region20
        $region19: #{tpu_custom_call.1} parent=11 // pred_region
          %s153 = ssub.s32 16, 16
          %154 = vsyncadd [#allocation5], %s153
          %s156 = sshll.u32 [#allocation6], 4
          %s157 = int_to_ptr.vmem [resolvable:$true] %s156
          %159 = dma.hbm_to_vmem [thread:$0]  %s2, 16, %s157, [#allocation5]
        $region20: #{tpu_custom_call.1} parent=11 // pred_fallthru
          _
      $region12: #{tpu_custom_call.1} parent=5 // pred_fallthru
        _
      %p160 = scmp.lt.s32.totalorder %s13, 16
      // Predicated region
      $region21: #{tpu_custom_call.1} parent=5 // pred_check
        %p161 = pneg %p160
      $region22: #{tpu_custom_call.1} parent=5 // pred_check_branch
        %163 = sbr.rel (%p161) target = $region24
      $region23: #{tpu_custom_call.1} parent=5 // pred_region
        // Predicated region
        $region25: #{tpu_custom_call.1} parent=23 // pred_check
          %p164 = pneg %p45
        $region26: #{tpu_custom_call.1} parent=23 // pred_check_branch
          %166 = sbr.rel (%p164) target = $region28
        $region27: #{tpu_custom_call.1} parent=23 // pred_region
          %s167 = sand.u32 %s35, 1
          %s168 = scalar_lea.sflag [#allocation3], %s167
          %s169 = sand.u32 %s35, 1
          %s170 = smul.addr %s169, 256
          %s171 = scalar_lea.vmem [#allocation2], %s170
          %s173 = ssub.s32 4096, 4096
          %174 = vsyncadd %s168, %s173
          %s175 = smul.addr %s20, 32
          %s176 = smul.addr %s175, 128
          %s177 = scalar_lea.hbm %s0, %s176
          %s178 = sshll.u32 %s171, 4
          %s179 = int_to_ptr.vmem [resolvable:$true] %s178
          %184 = dma.hbm_to_vmem [thread:$0]  %s177, 4096, %s179, %s168, 128, 128, 8
        $region28: #{tpu_custom_call.1} parent=23 // pred_fallthru
          _
      $region24: #{tpu_custom_call.1} parent=5 // pred_fallthru
        _
      %p185 = scmp.le.s32.totalorder 1, %s13
      %p186 = scmp.lt.s32.totalorder %s13, 17
      %p187 = pnand %p185, %p186
      %p188 = pneg %p187
      // Predicated region
      $region29: #{tpu_custom_call.1} parent=5 // pred_check
        _
      $region30: #{tpu_custom_call.1} parent=5 // pred_check_branch
        %190 = sbr.rel (%p187) target = $region32
      $region31: #{tpu_custom_call.1} parent=5 // pred_region
        %s191 = ssub.s32 %s13, 1
        %s192 = sand.u32 %s38, 1
        %s193 = scalar_lea.sflag [#allocation3], %s192
        %s194 = sand.u32 %s38, 1
        %s195 = smul.addr %s194, 256
        %s196 = scalar_lea.vmem [#allocation2], %s195
        // Predicated region
        $region33: #{tpu_custom_call.1} parent=31 // pred_check
          %p197 = pneg %p51
        $region34: #{tpu_custom_call.1} parent=31 // pred_check_branch
          %199 = sbr.rel (%p197) target = $region36
        $region35: #{tpu_custom_call.1} parent=31 // pred_region
          %200 = dma.done %s193, 4096
        $region36: #{tpu_custom_call.1} parent=31 // pred_fallthru
          _
        // Predicated region
        $region37: #{tpu_custom_call.1} parent=31 // pred_check
          %p201 = pneg %p72
        $region38: #{tpu_custom_call.1} parent=31 // pred_check_branch
          %203 = sbr.rel (%p201) target = $region40
        $region39: #{tpu_custom_call.1} parent=31 // pred_region
          %204 = dma.done [#allocation5], 2048
        $region40: #{tpu_custom_call.1} parent=31 // pred_fallthru
          _
        // Predicated region
        $region41: #{tpu_custom_call.1} parent=31 // pred_check
          %p205 = pneg %p93
        $region42: #{tpu_custom_call.1} parent=31 // pred_check_branch
          %207 = sbr.rel (%p205) target = $region44
        $region43: #{tpu_custom_call.1} parent=31 // pred_region
          %208 = dma.done [#allocation5], 16
        $region44: #{tpu_custom_call.1} parent=31 // pred_fallthru
          _
        %s209 = sand.u32 %s38, 1
        %s210 = scalar_lea.sflag [#allocation3], %s209
        %s211 = sand.u32 %s38, 1
        %s212 = smul.addr %s211, 256
        %s213 = scalar_lea.vmem [#allocation2], %s212
        %p214 = pneg %p51
        %p215 = pneg %p48
        %p216 = pneg %p72
        %p217 = pneg %p69
        %p218 = pneg %p93
        %p219 = pneg %p90
        %p220 = pneg %p121
        %p221 = pneg %p118
        %s222 = sand.u32 %s108, 1
        %s223 = sand.u32 %s108, 1
        %s224 = smul.addr %s223, 240
        %s225 = scalar_lea.vmem [#allocation7], %s224
        %v226 = vld [vmem:[%s196] sm:$0xff]
        %v227 = vld [vmem:[%s196 + $0x8] sm:$0xff]
        %v228 = vld [vmem:[%s196 + $0x10] sm:$0xff]
        %v229 = vld [vmem:[%s196 + $0x18] sm:$0xff]
        %v230 = vld [vmem:[%s196 + $0x20] sm:$0xff]
        %v231 = vld [vmem:[%s196 + $0x28] sm:$0xff]
        %v232 = vld [vmem:[%s196 + $0x30] sm:$0xff]
        %v233 = vld [vmem:[%s196 + $0x38] sm:$0xff]
        %v234 = vld [vmem:[%s196 + $0x40] sm:$0xff]
        %v235 = vld [vmem:[%s196 + $0x48] sm:$0xff]
        %v236 = vld [vmem:[%s196 + $0x50] sm:$0xff]
        %v237 = vld [vmem:[%s196 + $0x58] sm:$0xff]
        %v238 = vld [vmem:[%s196 + $0x60] sm:$0xff]
        %v239 = vld [vmem:[%s196 + $0x68] sm:$0xff]
        %v240 = vld [vmem:[%s196 + $0x70] sm:$0xff]
        %v241 = vld [vmem:[%s196 + $0x78] sm:$0xff]
        %v242 = vld [vmem:[%s196 + $0x80] sm:$0xff]
        %v243 = vld [vmem:[%s196 + $0x88] sm:$0xff]
        %v244 = vld [vmem:[%s196 + $0x90] sm:$0xff]
        %v245 = vld [vmem:[%s196 + $0x98] sm:$0xff]
        %v246 = vld [vmem:[%s196 + $0xa0] sm:$0xff]
        %v247 = vld [vmem:[%s196 + $0xa8] sm:$0xff]
        %v248 = vld [vmem:[%s196 + $0xb0] sm:$0xff]
        %v249 = vld [vmem:[%s196 + $0xb8] sm:$0xff]
        %v250 = vld [vmem:[%s196 + $0xc0] sm:$0xff]
        %v251 = vld [vmem:[%s196 + $0xc8] sm:$0xff]
        %v252 = vld [vmem:[%s196 + $0xd0] sm:$0xff]
        %v253 = vld [vmem:[%s196 + $0xd8] sm:$0xff]
        %v254 = vld [vmem:[%s196 + $0xe0] sm:$0xff]
        %v255 = vld [vmem:[%s196 + $0xe8] sm:$0xff]
        %v256 = vld [vmem:[%s196 + $0xf0] sm:$0xff]
        %v257 = vld [vmem:[%s196 + $0xf8] sm:$0xff]
        %s258 = smul.u32 %s23, 64
        %s259 = scalar_lea.vmem [#allocation4], %s258
        %v260 = vld [vmem:[%s259] sm:$0xff]
        %v261 = vld [vmem:[%s259 + $0x8] sm:$0xff]
        %s262 = sadd.s32 16, %s258
        %s263 = scalar_lea.vmem [#allocation4], %s262
        %v264 = vld [vmem:[%s263] sm:$0xff]
        %v265 = vld [vmem:[%s263 + $0x8] sm:$0xff]
        %vm297 = vcmask 1046528
        %v298 = vrot.slane %v226, 1
        %v299 = vrot.slane %v227, 1
        %v300 = vsel %vm297, %v298, %v299
        %v301 = vrot.slane %v228, 1
        %v302 = vsel %vm297, %v299, %v301
        %v303 = vrot.slane %v229, 1
        %v304 = vsel %vm297, %v301, %v303
        %v305 = vrot.slane %v230, 1
        %v306 = vsel %vm297, %v303, %v305
        %v307 = vrot.slane %v231, 1
        %v308 = vsel %vm297, %v305, %v307
        %v309 = vrot.slane %v232, 1
        %v310 = vsel %vm297, %v307, %v309
        %v311 = vrot.slane %v233, 1
        %v312 = vsel %vm297, %v309, %v311
        %v313 = vrot.slane %v234, 1
        %v314 = vsel %vm297, %v311, %v313
        %v315 = vrot.slane %v235, 1
        %v316 = vsel %vm297, %v313, %v315
        %v317 = vrot.slane %v236, 1
        %v318 = vsel %vm297, %v315, %v317
        %v319 = vrot.slane %v237, 1
        %v320 = vsel %vm297, %v317, %v319
        %v321 = vrot.slane %v238, 1
        %v322 = vsel %vm297, %v319, %v321
        %v323 = vrot.slane %v239, 1
        %v324 = vsel %vm297, %v321, %v323
        %v325 = vrot.slane %v240, 1
        %v326 = vsel %vm297, %v323, %v325
        %v327 = vrot.slane %v241, 1
        %v328 = vsel %vm297, %v325, %v327
        %v329 = vrot.slane %v242, 1
        %v330 = vsel %vm297, %v327, %v329
        %v331 = vrot.slane %v243, 1
        %v332 = vsel %vm297, %v329, %v331
        %v333 = vrot.slane %v244, 1
        %v334 = vsel %vm297, %v331, %v333
        %v335 = vrot.slane %v245, 1
        %v336 = vsel %vm297, %v333, %v335
        %v337 = vrot.slane %v246, 1
        %v338 = vsel %vm297, %v335, %v337
        %v339 = vrot.slane %v247, 1
        %v340 = vsel %vm297, %v337, %v339
        %v341 = vrot.slane %v248, 1
        %v342 = vsel %vm297, %v339, %v341
        %v343 = vrot.slane %v249, 1
        %v344 = vsel %vm297, %v341, %v343
        %v345 = vrot.slane %v250, 1
        %v346 = vsel %vm297, %v343, %v345
        %v347 = vrot.slane %v251, 1
        %v348 = vsel %vm297, %v345, %v347
        %v349 = vrot.slane %v252, 1
        %v350 = vsel %vm297, %v347, %v349
        %v351 = vrot.slane %v253, 1
        %v352 = vsel %vm297, %v349, %v351
        %v353 = vrot.slane %v254, 1
        %v354 = vsel %vm297, %v351, %v353
        %v355 = vrot.slane %v255, 1
        %v356 = vsel %vm297, %v353, %v355
        %v357 = vrot.slane %v256, 1
        %v358 = vsel %vm297, %v355, %v357
        %vm359 = vcmask 130048
        %v360 = vsel %vm359, %v300, 0
        %v362 = vsel %vm359, %v302, 0
        %v364 = vsel %vm359, %v304, 0
        %v366 = vsel %vm359, %v306, 0
        %v368 = vsel %vm359, %v308, 0
        %v370 = vsel %vm359, %v310, 0
        %v372 = vsel %vm359, %v312, 0
        %v374 = vsel %vm359, %v314, 0
        %v376 = vsel %vm359, %v316, 0
        %v378 = vsel %vm359, %v318, 0
        %v380 = vsel %vm359, %v320, 0
        %v382 = vsel %vm359, %v322, 0
        %v384 = vsel %vm359, %v324, 0
        %v386 = vsel %vm359, %v326, 0
        %v388 = vsel %vm359, %v328, 0
        %v390 = vsel %vm359, %v330, 0
        %v392 = vsel %vm359, %v332, 0
        %v394 = vsel %vm359, %v334, 0
        %v396 = vsel %vm359, %v336, 0
        %v398 = vsel %vm359, %v338, 0
        %v400 = vsel %vm359, %v340, 0
        %v402 = vsel %vm359, %v342, 0
        %v404 = vsel %vm359, %v344, 0
        %v406 = vsel %vm359, %v346, 0
        %v408 = vsel %vm359, %v348, 0
        %v410 = vsel %vm359, %v350, 0
        %v412 = vsel %vm359, %v352, 0
        %v414 = vsel %vm359, %v354, 0
        %v416 = vsel %vm359, %v356, 0
        %v418 = vsel %vm359, %v358, 0
        %420 = vmatprep.subr.mxu0 0.0
        %421 = vmatpush1.msra.mxu0 %v264
        %422 = vmatprep.subr.mxu0 0.0
        %423 = vmatpush1.msra.mxu0 %v265
        %424 = vmatprep.subr.mxu0 0.0
        %425 = vmatpush1.msra.mxu0 0.0
        %426 = vmatprep.subr.mxu0 0.0
        %427 = vmatpush1.msra.mxu0 0.0
        %428 = vmatprep.subr.mxu0 0.0
        %429 = vmatpush1.msra.mxu0 0.0
        %430 = vmatprep.subr.mxu0 0.0
        %431 = vmatpush1.msra.mxu0 0.0
        %432 = vmatprep.subr.mxu0 0.0
        %433 = vmatpush1.msra.mxu0 0.0
        %434 = vmatprep.subr.mxu0 0.0
        %435 = vmatpush1.msra.mxu0 0.0
        %436 = vmatprep.subr.mxu0 0.0
        %437 = vmatpush1.msra.mxu0 0.0
        %438 = vmatprep.subr.mxu0 0.0
        %439 = vmatpush1.msra.mxu0 0.0
        %440 = vmatprep.subr.mxu0 0.0
        %441 = vmatpush1.msra.mxu0 0.0
        %442 = vmatprep.subr.mxu0 0.0
        %443 = vmatpush1.msra.mxu0 0.0
        %444 = vmatprep.subr.mxu0 0.0
        %445 = vmatpush1.msra.mxu0 0.0
        %446 = vmatprep.subr.mxu0 0.0
        %447 = vmatpush1.msra.mxu0 0.0
        %448 = vmatprep.subr.mxu0 0.0
        %449 = vmatpush1.msra.mxu0 0.0
        %450 = vmatprep.subr.mxu0 0.0
        %451 = vmatpush1.msra.mxu0 0.0
        %452 = vmatprep.subr.mxu0 0.0
        %453 = vmatpush1.msra.mxu0 0.0
        %454 = vmatprep.subr.mxu0 0.0
        %455 = vmatpush1.msra.mxu0 0.0
        %456 = vmatprep.subr.mxu0 0.0
        %457 = vmatpush1.msra.mxu0 0.0
        %458 = vmatprep.subr.mxu0 0.0
        %459 = vmatpush1.msra.mxu0 0.0
        %460 = vmatprep.subr.mxu0 0.0
        %461 = vmatpush1.msra.mxu0 0.0
        %462 = vmatprep.subr.mxu0 0.0
        %463 = vmatpush1.msra.mxu0 0.0
        %464 = vmatprep.subr.mxu0 0.0
        %465 = vmatpush1.msra.mxu0 0.0
        %466 = vmatprep.subr.mxu0 0.0
        %467 = vmatpush1.msra.mxu0 0.0
        %468 = vmatprep.subr.mxu0 0.0
        %469 = vmatpush1.msra.mxu0 0.0
        %470 = vmatprep.subr.mxu0 0.0
        %471 = vmatpush1.msra.mxu0 0.0
        %472 = vmatprep.subr.mxu0 0.0
        %473 = vmatpush1.msra.mxu0 0.0
        %474 = vmatprep.subr.mxu0 0.0
        %475 = vmatpush1.msra.mxu0 0.0
        %476 = vmatprep.subr.mxu0 0.0
        %477 = vmatpush1.msra.mxu0 0.0
        %478 = vmatprep.subr.mxu0 0.0
        %479 = vmatpush1.msra.mxu0 0.0
        %480 = vmatprep.subr.mxu0 0.0
        %481 = vmatpush1.msra.mxu0 0.0
        %482 = vmatprep.subr.mxu0 0.0
        %483 = vmatpush1.msra.mxu0 0.0
        %484 = vmatprep.mubr.f32.mxu0 0.0
        %485 = vmatmul.mubr.f32.gmra.mrb[0].mxu0 %v360
        %v486 = vpop.f32.mrb[0].mxu0
        %v487 = vadd.f32 0.0, %v486
        %v488 = vpop.f32.mrb[0].mxu0
        %489 = vmatprep.mubr.f32.mxu0 0.0
        %490 = vmatmul.mubr.f32.gmra.mrb[0].mxu0 %v362
        %v491 = vpop.f32.mrb[0].mxu0
        %v492 = vadd.f32 0.0, %v491
        %v493 = vpop.f32.mrb[0].mxu0
        %494 = vmatprep.mubr.f32.mxu0 0.0
        %495 = vmatmul.mubr.f32.gmra.mrb[0].mxu0 %v364
        %v496 = vpop.f32.mrb[0].mxu0
        %v497 = vadd.f32 0.0, %v496
        %v498 = vpop.f32.mrb[0].mxu0
        %499 = vmatprep.mubr.f32.mxu0 0.0
        %500 = vmatmul.mubr.f32.gmra.mrb[0].mxu0 %v366
        %v501 = vpop.f32.mrb[0].mxu0
        %v502 = vadd.f32 0.0, %v501
        %v503 = vpop.f32.mrb[0].mxu0
        %504 = vmatprep.mubr.f32.mxu0 0.0
        %505 = vmatmul.mubr.f32.gmra.mrb[0].mxu0 %v368
        %v506 = vpop.f32.mrb[0].mxu0
        %v507 = vadd.f32 0.0, %v506
        %v508 = vpop.f32.mrb[0].mxu0
        %509 = vmatprep.mubr.f32.mxu0 0.0
        %510 = vmatmul.mubr.f32.gmra.mrb[0].mxu0 %v370
        %v511 = vpop.f32.mrb[0].mxu0
        %v512 = vadd.f32 0.0, %v511
        %v513 = vpop.f32.mrb[0].mxu0
        %514 = vmatprep.mubr.f32.mxu0 0.0
        %515 = vmatmul.mubr.f32.gmra.mrb[0].mxu0 %v372
        %v516 = vpop.f32.mrb[0].mxu0
        %v517 = vadd.f32 0.0, %v516
        %v518 = vpop.f32.mrb[0].mxu0
        %519 = vmatprep.mubr.f32.mxu0 0.0
        %520 = vmatmul.mubr.f32.gmra.mrb[0].mxu0 %v374
        %v521 = vpop.f32.mrb[0].mxu0
        %v522 = vadd.f32 0.0, %v521
        %v523 = vpop.f32.mrb[0].mxu0
        %524 = vmatprep.mubr.f32.mxu0 0.0
        %525 = vmatmul.mubr.f32.gmra.mrb[0].mxu0 %v376
        %v526 = vpop.f32.mrb[0].mxu0
        %v527 = vadd.f32 0.0, %v526
        %v528 = vpop.f32.mrb[0].mxu0
        %529 = vmatprep.mubr.f32.mxu0 0.0
        %530 = vmatmul.mubr.f32.gmra.mrb[0].mxu0 %v378
        %v531 = vpop.f32.mrb[0].mxu0
        %v532 = vadd.f32 0.0, %v531
        %v533 = vpop.f32.mrb[0].mxu0
        %534 = vmatprep.mubr.f32.mxu0 0.0
        %535 = vmatmul.mubr.f32.gmra.mrb[0].mxu0 %v380
        %v536 = vpop.f32.mrb[0].mxu0
        %v537 = vadd.f32 0.0, %v536
        %v538 = vpop.f32.mrb[0].mxu0
        %539 = vmatprep.mubr.f32.mxu0 0.0
        %540 = vmatmul.mubr.f32.gmra.mrb[0].mxu0 %v382
        %v541 = vpop.f32.mrb[0].mxu0
        %v542 = vadd.f32 0.0, %v541
        %v543 = vpop.f32.mrb[0].mxu0
        %544 = vmatprep.mubr.f32.mxu0 0.0
        %545 = vmatmul.mubr.f32.gmra.mrb[0].mxu0 %v384
        %v546 = vpop.f32.mrb[0].mxu0
        %v547 = vadd.f32 0.0, %v546
        %v548 = vpop.f32.mrb[0].mxu0
        %549 = vmatprep.mubr.f32.mxu0 0.0
        %550 = vmatmul.mubr.f32.gmra.mrb[0].mxu0 %v386
        %v551 = vpop.f32.mrb[0].mxu0
        %v552 = vadd.f32 0.0, %v551
        %v553 = vpop.f32.mrb[0].mxu0
        %554 = vmatprep.mubr.f32.mxu0 0.0
        %555 = vmatmul.mubr.f32.gmra.mrb[0].mxu0 %v388
        %v556 = vpop.f32.mrb[0].mxu0
        %v557 = vadd.f32 0.0, %v556
        %v558 = vpop.f32.mrb[0].mxu0
        %559 = vmatprep.mubr.f32.mxu0 0.0
        %560 = vmatmul.mubr.f32.gmra.mrb[0].mxu0 %v390
        %v561 = vpop.f32.mrb[0].mxu0
        %v562 = vadd.f32 0.0, %v561
        %v563 = vpop.f32.mrb[0].mxu0
        %564 = vmatprep.mubr.f32.mxu0 0.0
        %565 = vmatmul.mubr.f32.gmra.mrb[0].mxu0 %v392
        %v566 = vpop.f32.mrb[0].mxu0
        %v567 = vadd.f32 0.0, %v566
        %v568 = vpop.f32.mrb[0].mxu0
        %569 = vmatprep.mubr.f32.mxu0 0.0
        %570 = vmatmul.mubr.f32.gmra.mrb[0].mxu0 %v394
        %v571 = vpop.f32.mrb[0].mxu0
        %v572 = vadd.f32 0.0, %v571
        %v573 = vpop.f32.mrb[0].mxu0
        %574 = vmatprep.mubr.f32.mxu0 0.0
        %575 = vmatmul.mubr.f32.gmra.mrb[0].mxu0 %v396
        %v576 = vpop.f32.mrb[0].mxu0
        %v577 = vadd.f32 0.0, %v576
        %v578 = vpop.f32.mrb[0].mxu0
        %579 = vmatprep.mubr.f32.mxu0 0.0
        %580 = vmatmul.mubr.f32.gmra.mrb[0].mxu0 %v398
        %v581 = vpop.f32.mrb[0].mxu0
        %v582 = vadd.f32 0.0, %v581
        %v583 = vpop.f32.mrb[0].mxu0
        %584 = vmatprep.mubr.f32.mxu0 0.0
        %585 = vmatmul.mubr.f32.gmra.mrb[0].mxu0 %v400
        %v586 = vpop.f32.mrb[0].mxu0
        %v587 = vadd.f32 0.0, %v586
        %v588 = vpop.f32.mrb[0].mxu0
        %589 = vmatprep.mubr.f32.mxu0 0.0
        %590 = vmatmul.mubr.f32.gmra.mrb[0].mxu0 %v402
        %v591 = vpop.f32.mrb[0].mxu0
        %v592 = vadd.f32 0.0, %v591
        %v593 = vpop.f32.mrb[0].mxu0
        %594 = vmatprep.mubr.f32.mxu0 0.0
        %595 = vmatmul.mubr.f32.gmra.mrb[0].mxu0 %v404
        %v596 = vpop.f32.mrb[0].mxu0
        %v597 = vadd.f32 0.0, %v596
        %v598 = vpop.f32.mrb[0].mxu0
        %599 = vmatprep.mubr.f32.mxu0 0.0
        %600 = vmatmul.mubr.f32.gmra.mrb[0].mxu0 %v406
        %v601 = vpop.f32.mrb[0].mxu0
        %v602 = vadd.f32 0.0, %v601
        %v603 = vpop.f32.mrb[0].mxu0
        %604 = vmatprep.mubr.f32.mxu0 0.0
        %605 = vmatmul.mubr.f32.gmra.mrb[0].mxu0 %v408
        %v606 = vpop.f32.mrb[0].mxu0
        %v607 = vadd.f32 0.0, %v606
        %v608 = vpop.f32.mrb[0].mxu0
        %609 = vmatprep.mubr.f32.mxu0 0.0
        %610 = vmatmul.mubr.f32.gmra.mrb[0].mxu0 %v410
        %v611 = vpop.f32.mrb[0].mxu0
        %v612 = vadd.f32 0.0, %v611
        %v613 = vpop.f32.mrb[0].mxu0
        %614 = vmatprep.mubr.f32.mxu0 0.0
        %615 = vmatmul.mubr.f32.gmra.mrb[0].mxu0 %v412
        %v616 = vpop.f32.mrb[0].mxu0
        %v617 = vadd.f32 0.0, %v616
        %v618 = vpop.f32.mrb[0].mxu0
        %619 = vmatprep.mubr.f32.mxu0 0.0
        %620 = vmatmul.mubr.f32.gmra.mrb[0].mxu0 %v414
        %v621 = vpop.f32.mrb[0].mxu0
        %v622 = vadd.f32 0.0, %v621
        %v623 = vpop.f32.mrb[0].mxu0
        %624 = vmatprep.mubr.f32.mxu0 0.0
        %625 = vmatmul.mubr.f32.gmra.mrb[0].mxu0 %v416
        %v626 = vpop.f32.mrb[0].mxu0
        %v627 = vadd.f32 0.0, %v626
        %v628 = vpop.f32.mrb[0].mxu0
        %629 = vmatprep.mubr.f32.mxu0 0.0
        %630 = vmatmul.mubr.f32.gmra.mrb[0].mxu0 %v418
        %v631 = vpop.f32.mrb[0].mxu0
        %v632 = vadd.f32 0.0, %v631
        %v633 = vpop.f32.mrb[0].mxu0
        %634 = vdwg.mxu0
        %v635 = vsel %vm359, %v226, 0
        %v637 = vsel %vm359, %v227, 0
        %v639 = vsel %vm359, %v228, 0
        %v641 = vsel %vm359, %v229, 0
        %v643 = vsel %vm359, %v230, 0
        %v645 = vsel %vm359, %v231, 0
        %v647 = vsel %vm359, %v232, 0
        %v649 = vsel %vm359, %v233, 0
        %v651 = vsel %vm359, %v234, 0
        %v653 = vsel %vm359, %v235, 0
        %v655 = vsel %vm359, %v236, 0
        %v657 = vsel %vm359, %v237, 0
        %v659 = vsel %vm359, %v238, 0
        %v661 = vsel %vm359, %v239, 0
        %v663 = vsel %vm359, %v240, 0
        %v665 = vsel %vm359, %v241, 0
        %v667 = vsel %vm359, %v242, 0
        %v669 = vsel %vm359, %v243, 0
        %v671 = vsel %vm359, %v244, 0
        %v673 = vsel %vm359, %v245, 0
        %v675 = vsel %vm359, %v246, 0
        %v677 = vsel %vm359, %v247, 0
        %v679 = vsel %vm359, %v248, 0
        %v681 = vsel %vm359, %v249, 0
        %v683 = vsel %vm359, %v250, 0
        %v685 = vsel %vm359, %v251, 0
        %v687 = vsel %vm359, %v252, 0
        %v689 = vsel %vm359, %v253, 0
        %v691 = vsel %vm359, %v254, 0
        %v693 = vsel %vm359, %v255, 0
        %695 = vmatprep.subr.mxu0 0.0
        %696 = vmatpush1.msra.mxu0 %v260
        %697 = vmatprep.subr.mxu0 0.0
        %698 = vmatpush1.msra.mxu0 %v261
        %699 = vmatprep.subr.mxu0 0.0
        %700 = vmatpush1.msra.mxu0 0.0
        %701 = vmatprep.subr.mxu0 0.0
        %702 = vmatpush1.msra.mxu0 0.0
        %703 = vmatprep.subr.mxu0 0.0
        %704 = vmatpush1.msra.mxu0 0.0
        %705 = vmatprep.subr.mxu0 0.0
        %706 = vmatpush1.msra.mxu0 0.0
        %707 = vmatprep.subr.mxu0 0.0
        %708 = vmatpush1.msra.mxu0 0.0
        %709 = vmatprep.subr.mxu0 0.0
        %710 = vmatpush1.msra.mxu0 0.0
        %711 = vmatprep.subr.mxu0 0.0
        %712 = vmatpush1.msra.mxu0 0.0
        %713 = vmatprep.subr.mxu0 0.0
        %714 = vmatpush1.msra.mxu0 0.0
        %715 = vmatprep.subr.mxu0 0.0
        %716 = vmatpush1.msra.mxu0 0.0
        %717 = vmatprep.subr.mxu0 0.0
        %718 = vmatpush1.msra.mxu0 0.0
        %719 = vmatprep.subr.mxu0 0.0
        %720 = vmatpush1.msra.mxu0 0.0
        %721 = vmatprep.subr.mxu0 0.0
        %722 = vmatpush1.msra.mxu0 0.0
        %723 = vmatprep.subr.mxu0 0.0
        %724 = vmatpush1.msra.mxu0 0.0
        %725 = vmatprep.subr.mxu0 0.0
        %726 = vmatpush1.msra.mxu0 0.0
        %727 = vmatprep.subr.mxu0 0.0
        %728 = vmatpush1.msra.mxu0 0.0
        %729 = vmatprep.subr.mxu0 0.0
        %730 = vmatpush1.msra.mxu0 0.0
        %731 = vmatprep.subr.mxu0 0.0
        %732 = vmatpush1.msra.mxu0 0.0
        %733 = vmatprep.subr.mxu0 0.0
        %734 = vmatpush1.msra.mxu0 0.0
        %735 = vmatprep.subr.mxu0 0.0
        %736 = vmatpush1.msra.mxu0 0.0
        %737 = vmatprep.subr.mxu0 0.0
        %738 = vmatpush1.msra.mxu0 0.0
        %739 = vmatprep.subr.mxu0 0.0
        %740 = vmatpush1.msra.mxu0 0.0
        %741 = vmatprep.subr.mxu0 0.0
        %742 = vmatpush1.msra.mxu0 0.0
        %743 = vmatprep.subr.mxu0 0.0
        %744 = vmatpush1.msra.mxu0 0.0
        %745 = vmatprep.subr.mxu0 0.0
        %746 = vmatpush1.msra.mxu0 0.0
        %747 = vmatprep.subr.mxu0 0.0
        %748 = vmatpush1.msra.mxu0 0.0
        %749 = vmatprep.subr.mxu0 0.0
        %750 = vmatpush1.msra.mxu0 0.0
        %751 = vmatprep.subr.mxu0 0.0
        %752 = vmatpush1.msra.mxu0 0.0
        %753 = vmatprep.subr.mxu0 0.0
        %754 = vmatpush1.msra.mxu0 0.0
        %755 = vmatprep.subr.mxu0 0.0
        %756 = vmatpush1.msra.mxu0 0.0
        %757 = vmatprep.subr.mxu0 0.0
        %758 = vmatpush1.msra.mxu0 0.0
        %759 = vmatprep.mubr.f32.mxu0 0.0
        %760 = vmatmul.mubr.f32.gmra.mrb[0].mxu0 %v635
        %v761 = vpop.f32.mrb[0].mxu0
        %v762 = vadd.f32 %v487, %v761
        %v763 = vpop.f32.mrb[0].mxu0
        %764 = vmatprep.mubr.f32.mxu0 0.0
        %765 = vmatmul.mubr.f32.gmra.mrb[0].mxu0 %v637
        %v766 = vpop.f32.mrb[0].mxu0
        %v767 = vadd.f32 %v492, %v766
        %v768 = vpop.f32.mrb[0].mxu0
        %769 = vmatprep.mubr.f32.mxu0 0.0
        %770 = vmatmul.mubr.f32.gmra.mrb[0].mxu0 %v639
        %v771 = vpop.f32.mrb[0].mxu0
        %v772 = vadd.f32 %v497, %v771
        %v773 = vpop.f32.mrb[0].mxu0
        %774 = vmatprep.mubr.f32.mxu0 0.0
        %775 = vmatmul.mubr.f32.gmra.mrb[0].mxu0 %v641
        %v776 = vpop.f32.mrb[0].mxu0
        %v777 = vadd.f32 %v502, %v776
        %v778 = vpop.f32.mrb[0].mxu0
        %779 = vmatprep.mubr.f32.mxu0 0.0
        %780 = vmatmul.mubr.f32.gmra.mrb[0].mxu0 %v643
        %v781 = vpop.f32.mrb[0].mxu0
        %v782 = vadd.f32 %v507, %v781
        %v783 = vpop.f32.mrb[0].mxu0
        %784 = vmatprep.mubr.f32.mxu0 0.0
        %785 = vmatmul.mubr.f32.gmra.mrb[0].mxu0 %v645
        %v786 = vpop.f32.mrb[0].mxu0
        %v787 = vadd.f32 %v512, %v786
        %v788 = vpop.f32.mrb[0].mxu0
        %789 = vmatprep.mubr.f32.mxu0 0.0
        %790 = vmatmul.mubr.f32.gmra.mrb[0].mxu0 %v647
        %v791 = vpop.f32.mrb[0].mxu0
        %v792 = vadd.f32 %v517, %v791
        %v793 = vpop.f32.mrb[0].mxu0
        %794 = vmatprep.mubr.f32.mxu0 0.0
        %795 = vmatmul.mubr.f32.gmra.mrb[0].mxu0 %v649
        %v796 = vpop.f32.mrb[0].mxu0
        %v797 = vadd.f32 %v522, %v796
        %v798 = vpop.f32.mrb[0].mxu0
        %799 = vmatprep.mubr.f32.mxu0 0.0
        %800 = vmatmul.mubr.f32.gmra.mrb[0].mxu0 %v651
        %v801 = vpop.f32.mrb[0].mxu0
        %v802 = vadd.f32 %v527, %v801
        %v803 = vpop.f32.mrb[0].mxu0
        %804 = vmatprep.mubr.f32.mxu0 0.0
        %805 = vmatmul.mubr.f32.gmra.mrb[0].mxu0 %v653
        %v806 = vpop.f32.mrb[0].mxu0
        %v807 = vadd.f32 %v532, %v806
        %v808 = vpop.f32.mrb[0].mxu0
        %809 = vmatprep.mubr.f32.mxu0 0.0
        %810 = vmatmul.mubr.f32.gmra.mrb[0].mxu0 %v655
        %v811 = vpop.f32.mrb[0].mxu0
        %v812 = vadd.f32 %v537, %v811
        %v813 = vpop.f32.mrb[0].mxu0
        %814 = vmatprep.mubr.f32.mxu0 0.0
        %815 = vmatmul.mubr.f32.gmra.mrb[0].mxu0 %v657
        %v816 = vpop.f32.mrb[0].mxu0
        %v817 = vadd.f32 %v542, %v816
        %v818 = vpop.f32.mrb[0].mxu0
        %819 = vmatprep.mubr.f32.mxu0 0.0
        %820 = vmatmul.mubr.f32.gmra.mrb[0].mxu0 %v659
        %v821 = vpop.f32.mrb[0].mxu0
        %v822 = vadd.f32 %v547, %v821
        %v823 = vpop.f32.mrb[0].mxu0
        %824 = vmatprep.mubr.f32.mxu0 0.0
        %825 = vmatmul.mubr.f32.gmra.mrb[0].mxu0 %v661
        %v826 = vpop.f32.mrb[0].mxu0
        %v827 = vadd.f32 %v552, %v826
        %v828 = vpop.f32.mrb[0].mxu0
        %829 = vmatprep.mubr.f32.mxu0 0.0
        %830 = vmatmul.mubr.f32.gmra.mrb[0].mxu0 %v663
        %v831 = vpop.f32.mrb[0].mxu0
        %v832 = vadd.f32 %v557, %v831
        %v833 = vpop.f32.mrb[0].mxu0
        %834 = vmatprep.mubr.f32.mxu0 0.0
        %835 = vmatmul.mubr.f32.gmra.mrb[0].mxu0 %v665
        %v836 = vpop.f32.mrb[0].mxu0
        %v837 = vadd.f32 %v562, %v836
        %v838 = vpop.f32.mrb[0].mxu0
        %839 = vmatprep.mubr.f32.mxu0 0.0
        %840 = vmatmul.mubr.f32.gmra.mrb[0].mxu0 %v667
        %v841 = vpop.f32.mrb[0].mxu0
        %v842 = vadd.f32 %v567, %v841
        %v843 = vpop.f32.mrb[0].mxu0
        %844 = vmatprep.mubr.f32.mxu0 0.0
        %845 = vmatmul.mubr.f32.gmra.mrb[0].mxu0 %v669
        %v846 = vpop.f32.mrb[0].mxu0
        %v847 = vadd.f32 %v572, %v846
        %v848 = vpop.f32.mrb[0].mxu0
        %849 = vmatprep.mubr.f32.mxu0 0.0
        %850 = vmatmul.mubr.f32.gmra.mrb[0].mxu0 %v671
        %v851 = vpop.f32.mrb[0].mxu0
        %v852 = vadd.f32 %v577, %v851
        %v853 = vpop.f32.mrb[0].mxu0
        %854 = vmatprep.mubr.f32.mxu0 0.0
        %855 = vmatmul.mubr.f32.gmra.mrb[0].mxu0 %v673
        %v856 = vpop.f32.mrb[0].mxu0
        %v857 = vadd.f32 %v582, %v856
        %v858 = vpop.f32.mrb[0].mxu0
        %859 = vmatprep.mubr.f32.mxu0 0.0
        %860 = vmatmul.mubr.f32.gmra.mrb[0].mxu0 %v675
        %v861 = vpop.f32.mrb[0].mxu0
        %v862 = vadd.f32 %v587, %v861
        %v863 = vpop.f32.mrb[0].mxu0
        %864 = vmatprep.mubr.f32.mxu0 0.0
        %865 = vmatmul.mubr.f32.gmra.mrb[0].mxu0 %v677
        %v866 = vpop.f32.mrb[0].mxu0
        %v867 = vadd.f32 %v592, %v866
        %v868 = vpop.f32.mrb[0].mxu0
        %869 = vmatprep.mubr.f32.mxu0 0.0
        %870 = vmatmul.mubr.f32.gmra.mrb[0].mxu0 %v679
        %v871 = vpop.f32.mrb[0].mxu0
        %v872 = vadd.f32 %v597, %v871
        %v873 = vpop.f32.mrb[0].mxu0
        %874 = vmatprep.mubr.f32.mxu0 0.0
        %875 = vmatmul.mubr.f32.gmra.mrb[0].mxu0 %v681
        %v876 = vpop.f32.mrb[0].mxu0
        %v877 = vadd.f32 %v602, %v876
        %v878 = vpop.f32.mrb[0].mxu0
        %879 = vmatprep.mubr.f32.mxu0 0.0
        %880 = vmatmul.mubr.f32.gmra.mrb[0].mxu0 %v683
        %v881 = vpop.f32.mrb[0].mxu0
        %v882 = vadd.f32 %v607, %v881
        %v883 = vpop.f32.mrb[0].mxu0
        %884 = vmatprep.mubr.f32.mxu0 0.0
        %885 = vmatmul.mubr.f32.gmra.mrb[0].mxu0 %v685
        %v886 = vpop.f32.mrb[0].mxu0
        %v887 = vadd.f32 %v612, %v886
        %v888 = vpop.f32.mrb[0].mxu0
        %889 = vmatprep.mubr.f32.mxu0 0.0
        %890 = vmatmul.mubr.f32.gmra.mrb[0].mxu0 %v687
        %v891 = vpop.f32.mrb[0].mxu0
        %v892 = vadd.f32 %v617, %v891
        %v893 = vpop.f32.mrb[0].mxu0
        %894 = vmatprep.mubr.f32.mxu0 0.0
        %895 = vmatmul.mubr.f32.gmra.mrb[0].mxu0 %v689
        %v896 = vpop.f32.mrb[0].mxu0
        %v897 = vadd.f32 %v622, %v896
        %v898 = vpop.f32.mrb[0].mxu0
        %899 = vmatprep.mubr.f32.mxu0 0.0
        %900 = vmatmul.mubr.f32.gmra.mrb[0].mxu0 %v691
        %v901 = vpop.f32.mrb[0].mxu0
        %v902 = vadd.f32 %v627, %v901
        %v903 = vpop.f32.mrb[0].mxu0
        %904 = vmatprep.mubr.f32.mxu0 0.0
        %905 = vmatmul.mubr.f32.gmra.mrb[0].mxu0 %v693
        %v906 = vpop.f32.mrb[0].mxu0
        %v907 = vadd.f32 %v632, %v906
        %v908 = vpop.f32.mrb[0].mxu0
        %909 = vdwg.mxu0
        %s910 = sadd.s32 32, %s258
        %s911 = scalar_lea.vmem [#allocation4], %s910
        %v912 = vld [vmem:[%s911] sm:$0xff]
        %v913 = vld [vmem:[%s911 + $0x8] sm:$0xff]
        %v914 = vsel %vm359, %v256, 0
        %v917 = vsel %vm359, %v257, 0
        %919 = vmatprep.subr.mxu0 0.0
        %920 = vmatpush1.msra.mxu0 %v912
        %921 = vmatprep.subr.mxu0 0.0
        %922 = vmatpush1.msra.mxu0 %v913
        %923 = vmatprep.subr.mxu0 0.0
        %924 = vmatpush1.msra.mxu0 0.0
        %925 = vmatprep.subr.mxu0 0.0
        %926 = vmatpush1.msra.mxu0 0.0
        %927 = vmatprep.subr.mxu0 0.0
        %928 = vmatpush1.msra.mxu0 0.0
        %929 = vmatprep.subr.mxu0 0.0
        %930 = vmatpush1.msra.mxu0 0.0
        %931 = vmatprep.subr.mxu0 0.0
        %932 = vmatpush1.msra.mxu0 0.0
        %933 = vmatprep.subr.mxu0 0.0
        %934 = vmatpush1.msra.mxu0 0.0
        %935 = vmatprep.subr.mxu0 0.0
        %936 = vmatpush1.msra.mxu0 0.0
        %937 = vmatprep.subr.mxu0 0.0
        %938 = vmatpush1.msra.mxu0 0.0
        %939 = vmatprep.subr.mxu0 0.0
        %940 = vmatpush1.msra.mxu0 0.0
        %941 = vmatprep.subr.mxu0 0.0
        %942 = vmatpush1.msra.mxu0 0.0
        %943 = vmatprep.subr.mxu0 0.0
        %944 = vmatpush1.msra.mxu0 0.0
        %945 = vmatprep.subr.mxu0 0.0
        %946 = vmatpush1.msra.mxu0 0.0
        %947 = vmatprep.subr.mxu0 0.0
        %948 = vmatpush1.msra.mxu0 0.0
        %949 = vmatprep.subr.mxu0 0.0
        %950 = vmatpush1.msra.mxu0 0.0
        %951 = vmatprep.subr.mxu0 0.0
        %952 = vmatpush1.msra.mxu0 0.0
        %953 = vmatprep.subr.mxu0 0.0
        %954 = vmatpush1.msra.mxu0 0.0
        %955 = vmatprep.subr.mxu0 0.0
        %956 = vmatpush1.msra.mxu0 0.0
        %957 = vmatprep.subr.mxu0 0.0
        %958 = vmatpush1.msra.mxu0 0.0
        %959 = vmatprep.subr.mxu0 0.0
        %960 = vmatpush1.msra.mxu0 0.0
        %961 = vmatprep.subr.mxu0 0.0
        %962 = vmatpush1.msra.mxu0 0.0
        %963 = vmatprep.subr.mxu0 0.0
        %964 = vmatpush1.msra.mxu0 0.0
        %965 = vmatprep.subr.mxu0 0.0
        %966 = vmatpush1.msra.mxu0 0.0
        %967 = vmatprep.subr.mxu0 0.0
        %968 = vmatpush1.msra.mxu0 0.0
        %969 = vmatprep.subr.mxu0 0.0
        %970 = vmatpush1.msra.mxu0 0.0
        %971 = vmatprep.subr.mxu0 0.0
        %972 = vmatpush1.msra.mxu0 0.0
        %973 = vmatprep.subr.mxu0 0.0
        %974 = vmatpush1.msra.mxu0 0.0
        %975 = vmatprep.subr.mxu0 0.0
        %976 = vmatpush1.msra.mxu0 0.0
        %977 = vmatprep.subr.mxu0 0.0
        %978 = vmatpush1.msra.mxu0 0.0
        %979 = vmatprep.subr.mxu0 0.0
        %980 = vmatpush1.msra.mxu0 0.0
        %981 = vmatprep.subr.mxu0 0.0
        %982 = vmatpush1.msra.mxu0 0.0
        %983 = vmatprep.mubr.f32.mxu0 0.0
        %984 = vmatmul.mubr.f32.gmra.mrb[0].mxu0 %v639
        %v985 = vpop.f32.mrb[0].mxu0
        %v986 = vadd.f32 0.0, %v985
        %v987 = vpop.f32.mrb[0].mxu0
        %988 = vmatprep.mubr.f32.mxu0 0.0
        %989 = vmatmul.mubr.f32.gmra.mrb[0].mxu0 %v641
        %v990 = vpop.f32.mrb[0].mxu0
        %v991 = vadd.f32 0.0, %v990
        %v992 = vpop.f32.mrb[0].mxu0
        %993 = vmatprep.mubr.f32.mxu0 0.0
        %994 = vmatmul.mubr.f32.gmra.mrb[0].mxu0 %v643
        %v995 = vpop.f32.mrb[0].mxu0
        %v996 = vadd.f32 0.0, %v995
        %v997 = vpop.f32.mrb[0].mxu0
        %998 = vmatprep.mubr.f32.mxu0 0.0
        %999 = vmatmul.mubr.f32.gmra.mrb[0].mxu0 %v645
        %v1000 = vpop.f32.mrb[0].mxu0
        %v1001 = vadd.f32 0.0, %v1000
        %v1002 = vpop.f32.mrb[0].mxu0
        %1003 = vmatprep.mubr.f32.mxu0 0.0
        %1004 = vmatmul.mubr.f32.gmra.mrb[0].mxu0 %v647
        %v1005 = vpop.f32.mrb[0].mxu0
        %v1006 = vadd.f32 0.0, %v1005
        %v1007 = vpop.f32.mrb[0].mxu0
        %1008 = vmatprep.mubr.f32.mxu0 0.0
        %1009 = vmatmul.mubr.f32.gmra.mrb[0].mxu0 %v649
        %v1010 = vpop.f32.mrb[0].mxu0
        %v1011 = vadd.f32 0.0, %v1010
        %v1012 = vpop.f32.mrb[0].mxu0
        %1013 = vmatprep.mubr.f32.mxu0 0.0
        %1014 = vmatmul.mubr.f32.gmra.mrb[0].mxu0 %v651
        %v1015 = vpop.f32.mrb[0].mxu0
        %v1016 = vadd.f32 0.0, %v1015
        %v1017 = vpop.f32.mrb[0].mxu0
        %1018 = vmatprep.mubr.f32.mxu0 0.0
        %1019 = vmatmul.mubr.f32.gmra.mrb[0].mxu0 %v653
        %v1020 = vpop.f32.mrb[0].mxu0
        %v1021 = vadd.f32 0.0, %v1020
        %v1022 = vpop.f32.mrb[0].mxu0
        %1023 = vmatprep.mubr.f32.mxu0 0.0
        %1024 = vmatmul.mubr.f32.gmra.mrb[0].mxu0 %v655
        %v1025 = vpop.f32.mrb[0].mxu0
        %v1026 = vadd.f32 0.0, %v1025
        %v1027 = vpop.f32.mrb[0].mxu0
        %1028 = vmatprep.mubr.f32.mxu0 0.0
        %1029 = vmatmul.mubr.f32.gmra.mrb[0].mxu0 %v657
        %v1030 = vpop.f32.mrb[0].mxu0
        %v1031 = vadd.f32 0.0, %v1030
        %v1032 = vpop.f32.mrb[0].mxu0
        %1033 = vmatprep.mubr.f32.mxu0 0.0
        %1034 = vmatmul.mubr.f32.gmra.mrb[0].mxu0 %v659
        %v1035 = vpop.f32.mrb[0].mxu0
        %v1036 = vadd.f32 0.0, %v1035
        %v1037 = vpop.f32.mrb[0].mxu0
        %1038 = vmatprep.mubr.f32.mxu0 0.0
        %1039 = vmatmul.mubr.f32.gmra.mrb[0].mxu0 %v661
        %v1040 = vpop.f32.mrb[0].mxu0
        %v1041 = vadd.f32 0.0, %v1040
        %v1042 = vpop.f32.mrb[0].mxu0
        %1043 = vmatprep.mubr.f32.mxu0 0.0
        %1044 = vmatmul.mubr.f32.gmra.mrb[0].mxu0 %v663
        %v1045 = vpop.f32.mrb[0].mxu0
        %v1046 = vadd.f32 0.0, %v1045
        %v1047 = vpop.f32.mrb[0].mxu0
        %1048 = vmatprep.mubr.f32.mxu0 0.0
        %1049 = vmatmul.mubr.f32.gmra.mrb[0].mxu0 %v665
        %v1050 = vpop.f32.mrb[0].mxu0
        %v1051 = vadd.f32 0.0, %v1050
        %v1052 = vpop.f32.mrb[0].mxu0
        %1053 = vmatprep.mubr.f32.mxu0 0.0
        %1054 = vmatmul.mubr.f32.gmra.mrb[0].mxu0 %v667
        %v1055 = vpop.f32.mrb[0].mxu0
        %v1056 = vadd.f32 0.0, %v1055
        %v1057 = vpop.f32.mrb[0].mxu0
        %1058 = vmatprep.mubr.f32.mxu0 0.0
        %1059 = vmatmul.mubr.f32.gmra.mrb[0].mxu0 %v669
        %v1060 = vpop.f32.mrb[0].mxu0
        %v1061 = vadd.f32 0.0, %v1060
        %v1062 = vpop.f32.mrb[0].mxu0
        %1063 = vmatprep.mubr.f32.mxu0 0.0
        %1064 = vmatmul.mubr.f32.gmra.mrb[0].mxu0 %v671
        %v1065 = vpop.f32.mrb[0].mxu0
        %v1066 = vadd.f32 0.0, %v1065
        %v1067 = vpop.f32.mrb[0].mxu0
        %1068 = vmatprep.mubr.f32.mxu0 0.0
        %1069 = vmatmul.mubr.f32.gmra.mrb[0].mxu0 %v673
        %v1070 = vpop.f32.mrb[0].mxu0
        %v1071 = vadd.f32 0.0, %v1070
        %v1072 = vpop.f32.mrb[0].mxu0
        %1073 = vmatprep.mubr.f32.mxu0 0.0
        %1074 = vmatmul.mubr.f32.gmra.mrb[0].mxu0 %v675
        %v1075 = vpop.f32.mrb[0].mxu0
        %v1076 = vadd.f32 0.0, %v1075
        %v1077 = vpop.f32.mrb[0].mxu0
        %1078 = vmatprep.mubr.f32.mxu0 0.0
        %1079 = vmatmul.mubr.f32.gmra.mrb[0].mxu0 %v677
        %v1080 = vpop.f32.mrb[0].mxu0
        %v1081 = vadd.f32 0.0, %v1080
        %v1082 = vpop.f32.mrb[0].mxu0
        %1083 = vmatprep.mubr.f32.mxu0 0.0
        %1084 = vmatmul.mubr.f32.gmra.mrb[0].mxu0 %v679
        %v1085 = vpop.f32.mrb[0].mxu0
        %v1086 = vadd.f32 0.0, %v1085
        %v1087 = vpop.f32.mrb[0].mxu0
        %1088 = vmatprep.mubr.f32.mxu0 0.0
        %1089 = vmatmul.mubr.f32.gmra.mrb[0].mxu0 %v681
        %v1090 = vpop.f32.mrb[0].mxu0
        %v1091 = vadd.f32 0.0, %v1090
        %v1092 = vpop.f32.mrb[0].mxu0
        %1093 = vmatprep.mubr.f32.mxu0 0.0
        %1094 = vmatmul.mubr.f32.gmra.mrb[0].mxu0 %v683
        %v1095 = vpop.f32.mrb[0].mxu0
        %v1096 = vadd.f32 0.0, %v1095
        %v1097 = vpop.f32.mrb[0].mxu0
        %1098 = vmatprep.mubr.f32.mxu0 0.0
        %1099 = vmatmul.mubr.f32.gmra.mrb[0].mxu0 %v685
        %v1100 = vpop.f32.mrb[0].mxu0
        %v1101 = vadd.f32 0.0, %v1100
        %v1102 = vpop.f32.mrb[0].mxu0
        %1103 = vmatprep.mubr.f32.mxu0 0.0
        %1104 = vmatmul.mubr.f32.gmra.mrb[0].mxu0 %v687
        %v1105 = vpop.f32.mrb[0].mxu0
        %v1106 = vadd.f32 0.0, %v1105
        %v1107 = vpop.f32.mrb[0].mxu0
        %1108 = vmatprep.mubr.f32.mxu0 0.0
        %1109 = vmatmul.mubr.f32.gmra.mrb[0].mxu0 %v689
        %v1110 = vpop.f32.mrb[0].mxu0
        %v1111 = vadd.f32 0.0, %v1110
        %v1112 = vpop.f32.mrb[0].mxu0
        %1113 = vmatprep.mubr.f32.mxu0 0.0
        %1114 = vmatmul.mubr.f32.gmra.mrb[0].mxu0 %v691
        %v1115 = vpop.f32.mrb[0].mxu0
        %v1116 = vadd.f32 0.0, %v1115
        %v1117 = vpop.f32.mrb[0].mxu0
        %1118 = vmatprep.mubr.f32.mxu0 0.0
        %1119 = vmatmul.mubr.f32.gmra.mrb[0].mxu0 %v693
        %v1120 = vpop.f32.mrb[0].mxu0
        %v1121 = vadd.f32 0.0, %v1120
        %v1122 = vpop.f32.mrb[0].mxu0
        %1123 = vmatprep.mubr.f32.mxu0 0.0
        %1124 = vmatmul.mubr.f32.gmra.mrb[0].mxu0 %v914
        %v1125 = vpop.f32.mrb[0].mxu0
        %v1126 = vadd.f32 0.0, %v1125
        %v1127 = vpop.f32.mrb[0].mxu0
        %1128 = vmatprep.mubr.f32.mxu0 0.0
        %1129 = vmatmul.mubr.f32.gmra.mrb[0].mxu0 %v917
        %v1130 = vpop.f32.mrb[0].mxu0
        %v1131 = vadd.f32 0.0, %v1130
        %v1132 = vpop.f32.mrb[0].mxu0
        %1133 = vdwg.mxu0
        %v1134 = vadd.f32 %v762, %v986
        %v1135 = vadd.f32 %v767, %v991
        %v1136 = vadd.f32 %v772, %v996
        %v1137 = vadd.f32 %v777, %v1001
        %v1138 = vadd.f32 %v782, %v1006
        %v1139 = vadd.f32 %v787, %v1011
        %v1140 = vadd.f32 %v792, %v1016
        %v1141 = vadd.f32 %v797, %v1021
        %v1142 = vadd.f32 %v802, %v1026
        %v1143 = vadd.f32 %v807, %v1031
        %v1144 = vadd.f32 %v812, %v1036
        %v1145 = vadd.f32 %v817, %v1041
        %v1146 = vadd.f32 %v822, %v1046
        %v1147 = vadd.f32 %v827, %v1051
        %v1148 = vadd.f32 %v832, %v1056
        %v1149 = vadd.f32 %v837, %v1061
        %v1150 = vadd.f32 %v842, %v1066
        %v1151 = vadd.f32 %v847, %v1071
        %v1152 = vadd.f32 %v852, %v1076
        %v1153 = vadd.f32 %v857, %v1081
        %v1154 = vadd.f32 %v862, %v1086
        %v1155 = vadd.f32 %v867, %v1091
        %v1156 = vadd.f32 %v872, %v1096
        %v1157 = vadd.f32 %v877, %v1101
        %v1158 = vadd.f32 %v882, %v1106
        %v1159 = vadd.f32 %v887, %v1111
        %v1160 = vadd.f32 %v892, %v1116
        %v1161 = vadd.f32 %v897, %v1121
        %v1162 = vadd.f32 %v902, %v1126
        %v1163 = vadd.f32 %v907, %v1131
        %s1164 = sadd.s32 48, %s258
        %s1165 = scalar_lea.vmem [#allocation4], %s1164
        %v1166 = vld [vmem:[%s1165] sm:$0xff]
        %v1167 = vld [vmem:[%s1165 + $0x8] sm:$0xff]
        %v1169 = vrot.slane %v257, 1
        %v1170 = vsel %vm297, %v357, %v1169
        %v1171 = vrot.slane 0.0, 1
        %v1172 = vsel %vm297, %v1169, %v1171
        %v1173 = vsel %vm359, %v1170, 0
        %v1175 = vsel %vm359, %v1172, 0
        %1177 = vmatprep.subr.mxu0 0.0
        %1178 = vmatpush1.msra.mxu0 %v1166
        %1179 = vmatprep.subr.mxu0 0.0
        %1180 = vmatpush1.msra.mxu0 %v1167
        %1181 = vmatprep.subr.mxu0 0.0
        %1182 = vmatpush1.msra.mxu0 0.0
        %1183 = vmatprep.subr.mxu0 0.0
        %1184 = vmatpush1.msra.mxu0 0.0
        %1185 = vmatprep.subr.mxu0 0.0
        %1186 = vmatpush1.msra.mxu0 0.0
        %1187 = vmatprep.subr.mxu0 0.0
        %1188 = vmatpush1.msra.mxu0 0.0
        %1189 = vmatprep.subr.mxu0 0.0
        %1190 = vmatpush1.msra.mxu0 0.0
        %1191 = vmatprep.subr.mxu0 0.0
        %1192 = vmatpush1.msra.mxu0 0.0
        %1193 = vmatprep.subr.mxu0 0.0
        %1194 = vmatpush1.msra.mxu0 0.0
        %1195 = vmatprep.subr.mxu0 0.0
        %1196 = vmatpush1.msra.mxu0 0.0
        %1197 = vmatprep.subr.mxu0 0.0
        %1198 = vmatpush1.msra.mxu0 0.0
        %1199 = vmatprep.subr.mxu0 0.0
        %1200 = vmatpush1.msra.mxu0 0.0
        %1201 = vmatprep.subr.mxu0 0.0
        %1202 = vmatpush1.msra.mxu0 0.0
        %1203 = vmatprep.subr.mxu0 0.0
        %1204 = vmatpush1.msra.mxu0 0.0
        %1205 = vmatprep.subr.mxu0 0.0
        %1206 = vmatpush1.msra.mxu0 0.0
        %1207 = vmatprep.subr.mxu0 0.0
        %1208 = vmatpush1.msra.mxu0 0.0
        %1209 = vmatprep.subr.mxu0 0.0
        %1210 = vmatpush1.msra.mxu0 0.0
        %1211 = vmatprep.subr.mxu0 0.0
        %1212 = vmatpush1.msra.mxu0 0.0
        %1213 = vmatprep.subr.mxu0 0.0
        %1214 = vmatpush1.msra.mxu0 0.0
        %1215 = vmatprep.subr.mxu0 0.0
        %1216 = vmatpush1.msra.mxu0 0.0
        %1217 = vmatprep.subr.mxu0 0.0
        %1218 = vmatpush1.msra.mxu0 0.0
        %1219 = vmatprep.subr.mxu0 0.0
        %1220 = vmatpush1.msra.mxu0 0.0
        %1221 = vmatprep.subr.mxu0 0.0
        %1222 = vmatpush1.msra.mxu0 0.0
        %1223 = vmatprep.subr.mxu0 0.0
        %1224 = vmatpush1.msra.mxu0 0.0
        %1225 = vmatprep.subr.mxu0 0.0
        %1226 = vmatpush1.msra.mxu0 0.0
        %1227 = vmatprep.subr.mxu0 0.0
        %1228 = vmatpush1.msra.mxu0 0.0
        %1229 = vmatprep.subr.mxu0 0.0
        %1230 = vmatpush1.msra.mxu0 0.0
        %1231 = vmatprep.subr.mxu0 0.0
        %1232 = vmatpush1.msra.mxu0 0.0
        %1233 = vmatprep.subr.mxu0 0.0
        %1234 = vmatpush1.msra.mxu0 0.0
        %1235 = vmatprep.subr.mxu0 0.0
        %1236 = vmatpush1.msra.mxu0 0.0
        %1237 = vmatprep.subr.mxu0 0.0
        %1238 = vmatpush1.msra.mxu0 0.0
        %1239 = vmatprep.subr.mxu0 0.0
        %1240 = vmatpush1.msra.mxu0 0.0
        %1241 = vmatprep.mubr.f32.mxu0 0.0
        %1242 = vmatmul.mubr.f32.gmra.mrb[0].mxu0 %v364
        %v1243 = vpop.f32.mrb[0].mxu0
        %v1244 = vadd.f32 0.0, %v1243
        %v1245 = vpop.f32.mrb[0].mxu0
        %1246 = vmatprep.mubr.f32.mxu0 0.0
        %1247 = vmatmul.mubr.f32.gmra.mrb[0].mxu0 %v366
        %v1248 = vpop.f32.mrb[0].mxu0
        %v1249 = vadd.f32 0.0, %v1248
        %v1250 = vpop.f32.mrb[0].mxu0
        %1251 = vmatprep.mubr.f32.mxu0 0.0
        %1252 = vmatmul.mubr.f32.gmra.mrb[0].mxu0 %v368
        %v1253 = vpop.f32.mrb[0].mxu0
        %v1254 = vadd.f32 0.0, %v1253
        %v1255 = vpop.f32.mrb[0].mxu0
        %1256 = vmatprep.mubr.f32.mxu0 0.0
        %1257 = vmatmul.mubr.f32.gmra.mrb[0].mxu0 %v370
        %v1258 = vpop.f32.mrb[0].mxu0
        %v1259 = vadd.f32 0.0, %v1258
        %v1260 = vpop.f32.mrb[0].mxu0
        %1261 = vmatprep.mubr.f32.mxu0 0.0
        %1262 = vmatmul.mubr.f32.gmra.mrb[0].mxu0 %v372
        %v1263 = vpop.f32.mrb[0].mxu0
        %v1264 = vadd.f32 0.0, %v1263
        %v1265 = vpop.f32.mrb[0].mxu0
        %1266 = vmatprep.mubr.f32.mxu0 0.0
        %1267 = vmatmul.mubr.f32.gmra.mrb[0].mxu0 %v374
        %v1268 = vpop.f32.mrb[0].mxu0
        %v1269 = vadd.f32 0.0, %v1268
        %v1270 = vpop.f32.mrb[0].mxu0
        %1271 = vmatprep.mubr.f32.mxu0 0.0
        %1272 = vmatmul.mubr.f32.gmra.mrb[0].mxu0 %v376
        %v1273 = vpop.f32.mrb[0].mxu0
        %v1274 = vadd.f32 0.0, %v1273
        %v1275 = vpop.f32.mrb[0].mxu0
        %1276 = vmatprep.mubr.f32.mxu0 0.0
        %1277 = vmatmul.mubr.f32.gmra.mrb[0].mxu0 %v378
        %v1278 = vpop.f32.mrb[0].mxu0
        %v1279 = vadd.f32 0.0, %v1278
        %v1280 = vpop.f32.mrb[0].mxu0
        %1281 = vmatprep.mubr.f32.mxu0 0.0
        %1282 = vmatmul.mubr.f32.gmra.mrb[0].mxu0 %v380
        %v1283 = vpop.f32.mrb[0].mxu0
        %v1284 = vadd.f32 0.0, %v1283
        %v1285 = vpop.f32.mrb[0].mxu0
        %1286 = vmatprep.mubr.f32.mxu0 0.0
        %1287 = vmatmul.mubr.f32.gmra.mrb[0].mxu0 %v382
        %v1288 = vpop.f32.mrb[0].mxu0
        %v1289 = vadd.f32 0.0, %v1288
        %v1290 = vpop.f32.mrb[0].mxu0
        %1291 = vmatprep.mubr.f32.mxu0 0.0
        %1292 = vmatmul.mubr.f32.gmra.mrb[0].mxu0 %v384
        %v1293 = vpop.f32.mrb[0].mxu0
        %v1294 = vadd.f32 0.0, %v1293
        %v1295 = vpop.f32.mrb[0].mxu0
        %1296 = vmatprep.mubr.f32.mxu0 0.0
        %1297 = vmatmul.mubr.f32.gmra.mrb[0].mxu0 %v386
        %v1298 = vpop.f32.mrb[0].mxu0
        %v1299 = vadd.f32 0.0, %v1298
        %v1300 = vpop.f32.mrb[0].mxu0
        %1301 = vmatprep.mubr.f32.mxu0 0.0
        %1302 = vmatmul.mubr.f32.gmra.mrb[0].mxu0 %v388
        %v1303 = vpop.f32.mrb[0].mxu0
        %v1304 = vadd.f32 0.0, %v1303
        %v1305 = vpop.f32.mrb[0].mxu0
        %1306 = vmatprep.mubr.f32.mxu0 0.0
        %1307 = vmatmul.mubr.f32.gmra.mrb[0].mxu0 %v390
        %v1308 = vpop.f32.mrb[0].mxu0
        %v1309 = vadd.f32 0.0, %v1308
        %v1310 = vpop.f32.mrb[0].mxu0
        %1311 = vmatprep.mubr.f32.mxu0 0.0
        %1312 = vmatmul.mubr.f32.gmra.mrb[0].mxu0 %v392
        %v1313 = vpop.f32.mrb[0].mxu0
        %v1314 = vadd.f32 0.0, %v1313
        %v1315 = vpop.f32.mrb[0].mxu0
        %1316 = vmatprep.mubr.f32.mxu0 0.0
        %1317 = vmatmul.mubr.f32.gmra.mrb[0].mxu0 %v394
        %v1318 = vpop.f32.mrb[0].mxu0
        %v1319 = vadd.f32 0.0, %v1318
        %v1320 = vpop.f32.mrb[0].mxu0
        %1321 = vmatprep.mubr.f32.mxu0 0.0
        %1322 = vmatmul.mubr.f32.gmra.mrb[0].mxu0 %v396
        %v1323 = vpop.f32.mrb[0].mxu0
        %v1324 = vadd.f32 0.0, %v1323
        %v1325 = vpop.f32.mrb[0].mxu0
        %1326 = vmatprep.mubr.f32.mxu0 0.0
        %1327 = vmatmul.mubr.f32.gmra.mrb[0].mxu0 %v398
        %v1328 = vpop.f32.mrb[0].mxu0
        %v1329 = vadd.f32 0.0, %v1328
        %v1330 = vpop.f32.mrb[0].mxu0
        %1331 = vmatprep.mubr.f32.mxu0 0.0
        %1332 = vmatmul.mubr.f32.gmra.mrb[0].mxu0 %v400
        %v1333 = vpop.f32.mrb[0].mxu0
        %v1334 = vadd.f32 0.0, %v1333
        %v1335 = vpop.f32.mrb[0].mxu0
        %1336 = vmatprep.mubr.f32.mxu0 0.0
        %1337 = vmatmul.mubr.f32.gmra.mrb[0].mxu0 %v402
        %v1338 = vpop.f32.mrb[0].mxu0
        %v1339 = vadd.f32 0.0, %v1338
        %v1340 = vpop.f32.mrb[0].mxu0
        %1341 = vmatprep.mubr.f32.mxu0 0.0
        %1342 = vmatmul.mubr.f32.gmra.mrb[0].mxu0 %v404
        %v1343 = vpop.f32.mrb[0].mxu0
        %v1344 = vadd.f32 0.0, %v1343
        %v1345 = vpop.f32.mrb[0].mxu0
        %1346 = vmatprep.mubr.f32.mxu0 0.0
        %1347 = vmatmul.mubr.f32.gmra.mrb[0].mxu0 %v406
        %v1348 = vpop.f32.mrb[0].mxu0
        %v1349 = vadd.f32 0.0, %v1348
        %v1350 = vpop.f32.mrb[0].mxu0
        %1351 = vmatprep.mubr.f32.mxu0 0.0
        %1352 = vmatmul.mubr.f32.gmra.mrb[0].mxu0 %v408
        %v1353 = vpop.f32.mrb[0].mxu0
        %v1354 = vadd.f32 0.0, %v1353
        %v1355 = vpop.f32.mrb[0].mxu0
        %1356 = vmatprep.mubr.f32.mxu0 0.0
        %1357 = vmatmul.mubr.f32.gmra.mrb[0].mxu0 %v410
        %v1358 = vpop.f32.mrb[0].mxu0
        %v1359 = vadd.f32 0.0, %v1358
        %v1360 = vpop.f32.mrb[0].mxu0
        %1361 = vmatprep.mubr.f32.mxu0 0.0
        %1362 = vmatmul.mubr.f32.gmra.mrb[0].mxu0 %v412
        %v1363 = vpop.f32.mrb[0].mxu0
        %v1364 = vadd.f32 0.0, %v1363
        %v1365 = vpop.f32.mrb[0].mxu0
        %1366 = vmatprep.mubr.f32.mxu0 0.0
        %1367 = vmatmul.mubr.f32.gmra.mrb[0].mxu0 %v414
        %v1368 = vpop.f32.mrb[0].mxu0
        %v1369 = vadd.f32 0.0, %v1368
        %v1370 = vpop.f32.mrb[0].mxu0
        %1371 = vmatprep.mubr.f32.mxu0 0.0
        %1372 = vmatmul.mubr.f32.gmra.mrb[0].mxu0 %v416
        %v1373 = vpop.f32.mrb[0].mxu0
        %v1374 = vadd.f32 0.0, %v1373
        %v1375 = vpop.f32.mrb[0].mxu0
        %1376 = vmatprep.mubr.f32.mxu0 0.0
        %1377 = vmatmul.mubr.f32.gmra.mrb[0].mxu0 %v418
        %v1378 = vpop.f32.mrb[0].mxu0
        %v1379 = vadd.f32 0.0, %v1378
        %v1380 = vpop.f32.mrb[0].mxu0
        %1381 = vmatprep.mubr.f32.mxu0 0.0
        %1382 = vmatmul.mubr.f32.gmra.mrb[0].mxu0 %v1173
        %v1383 = vpop.f32.mrb[0].mxu0
        %v1384 = vadd.f32 0.0, %v1383
        %v1385 = vpop.f32.mrb[0].mxu0
        %1386 = vmatprep.mubr.f32.mxu0 0.0
        %1387 = vmatmul.mubr.f32.gmra.mrb[0].mxu0 %v1175
        %v1388 = vpop.f32.mrb[0].mxu0
        %v1389 = vadd.f32 0.0, %v1388
        %v1390 = vpop.f32.mrb[0].mxu0
        %1391 = vdwg.mxu0
        %v1392 = vadd.f32 %v1134, %v1244
        %v1393 = vadd.f32 %v1135, %v1249
        %v1394 = vadd.f32 %v1136, %v1254
        %v1395 = vadd.f32 %v1137, %v1259
        %v1396 = vadd.f32 %v1138, %v1264
        %v1397 = vadd.f32 %v1139, %v1269
        %v1398 = vadd.f32 %v1140, %v1274
        %v1399 = vadd.f32 %v1141, %v1279
        %v1400 = vadd.f32 %v1142, %v1284
        %v1401 = vadd.f32 %v1143, %v1289
        %v1402 = vadd.f32 %v1144, %v1294
        %v1403 = vadd.f32 %v1145, %v1299
        %v1404 = vadd.f32 %v1146, %v1304
        %v1405 = vadd.f32 %v1147, %v1309
        %v1406 = vadd.f32 %v1148, %v1314
        %v1407 = vadd.f32 %v1149, %v1319
        %v1408 = vadd.f32 %v1150, %v1324
        %v1409 = vadd.f32 %v1151, %v1329
        %v1410 = vadd.f32 %v1152, %v1334
        %v1411 = vadd.f32 %v1153, %v1339
        %v1412 = vadd.f32 %v1154, %v1344
        %v1413 = vadd.f32 %v1155, %v1349
        %v1414 = vadd.f32 %v1156, %v1354
        %v1415 = vadd.f32 %v1157, %v1359
        %v1416 = vadd.f32 %v1158, %v1364
        %v1417 = vadd.f32 %v1159, %v1369
        %v1418 = vadd.f32 %v1160, %v1374
        %v1419 = vadd.f32 %v1161, %v1379
        %v1420 = vadd.f32 %v1162, %v1384
        %v1421 = vadd.f32 %v1163, %v1389
        %v1422 = vld [vmem:[#allocation6] sm:$0x1]
        %v1424 = vlaneseq
        %v1425 = vshrl.u32 %v1424, 7
        %v1426 = vsub.s32 0, %v1425
        %v1427 = vrot.slane %v1422, %v1426
        %v1429 = vadd.f32 %v1392, %v1427
        %v1430 = vadd.f32 %v1393, %v1427
        %v1431 = vadd.f32 %v1394, %v1427
        %v1432 = vadd.f32 %v1395, %v1427
        %v1433 = vadd.f32 %v1396, %v1427
        %v1434 = vadd.f32 %v1397, %v1427
        %v1435 = vadd.f32 %v1398, %v1427
        %v1436 = vadd.f32 %v1399, %v1427
        %v1437 = vadd.f32 %v1400, %v1427
        %v1438 = vadd.f32 %v1401, %v1427
        %v1439 = vadd.f32 %v1402, %v1427
        %v1440 = vadd.f32 %v1403, %v1427
        %v1441 = vadd.f32 %v1404, %v1427
        %v1442 = vadd.f32 %v1405, %v1427
        %v1443 = vadd.f32 %v1406, %v1427
        %v1444 = vadd.f32 %v1407, %v1427
        %v1445 = vadd.f32 %v1408, %v1427
        %v1446 = vadd.f32 %v1409, %v1427
        %v1447 = vadd.f32 %v1410, %v1427
        %v1448 = vadd.f32 %v1411, %v1427
        %v1449 = vadd.f32 %v1412, %v1427
        %v1450 = vadd.f32 %v1413, %v1427
        %v1451 = vadd.f32 %v1414, %v1427
        %v1452 = vadd.f32 %v1415, %v1427
        %v1453 = vadd.f32 %v1416, %v1427
        %v1454 = vadd.f32 %v1417, %v1427
        %v1455 = vadd.f32 %v1418, %v1427
        %v1456 = vadd.f32 %v1419, %v1427
        %v1457 = vadd.f32 %v1420, %v1427
        %v1458 = vadd.f32 %v1421, %v1427
        %vm1459 = vcmask 261120
        %1460 = vst.msk [vmem:[%s225] sm:$0xff] %vm1459, %v1429
        %vm1461 = vcmask 260096
        %1462 = vst.msk [vmem:[%s225 + $0x8] sm:$0x7f] %vm1461, %v1430
        %1463 = vst.msk [vmem:[%s225 + $0x10] sm:$0xff] %vm1459, %v1431
        %1464 = vst.msk [vmem:[%s225 + $0x18] sm:$0x7f] %vm1461, %v1432
        %1465 = vst.msk [vmem:[%s225 + $0x20] sm:$0xff] %vm1459, %v1433
        %1466 = vst.msk [vmem:[%s225 + $0x28] sm:$0x7f] %vm1461, %v1434
        %1467 = vst.msk [vmem:[%s225 + $0x30] sm:$0xff] %vm1459, %v1435
        %1468 = vst.msk [vmem:[%s225 + $0x38] sm:$0x7f] %vm1461, %v1436
        %1469 = vst.msk [vmem:[%s225 + $0x40] sm:$0xff] %vm1459, %v1437
        %1470 = vst.msk [vmem:[%s225 + $0x48] sm:$0x7f] %vm1461, %v1438
        %1471 = vst.msk [vmem:[%s225 + $0x50] sm:$0xff] %vm1459, %v1439
        %1472 = vst.msk [vmem:[%s225 + $0x58] sm:$0x7f] %vm1461, %v1440
        %1473 = vst.msk [vmem:[%s225 + $0x60] sm:$0xff] %vm1459, %v1441
        %1474 = vst.msk [vmem:[%s225 + $0x68] sm:$0x7f] %vm1461, %v1442
        %1475 = vst.msk [vmem:[%s225 + $0x70] sm:$0xff] %vm1459, %v1443
        %1476 = vst.msk [vmem:[%s225 + $0x78] sm:$0x7f] %vm1461, %v1444
        %1477 = vst.msk [vmem:[%s225 + $0x80] sm:$0xff] %vm1459, %v1445
        %1478 = vst.msk [vmem:[%s225 + $0x88] sm:$0x7f] %vm1461, %v1446
        %1479 = vst.msk [vmem:[%s225 + $0x90] sm:$0xff] %vm1459, %v1447
        %1480 = vst.msk [vmem:[%s225 + $0x98] sm:$0x7f] %vm1461, %v1448
        %1481 = vst.msk [vmem:[%s225 + $0xa0] sm:$0xff] %vm1459, %v1449
        %1482 = vst.msk [vmem:[%s225 + $0xa8] sm:$0x7f] %vm1461, %v1450
        %1483 = vst.msk [vmem:[%s225 + $0xb0] sm:$0xff] %vm1459, %v1451
        %1484 = vst.msk [vmem:[%s225 + $0xb8] sm:$0x7f] %vm1461, %v1452
        %1485 = vst.msk [vmem:[%s225 + $0xc0] sm:$0xff] %vm1459, %v1453
        %1486 = vst.msk [vmem:[%s225 + $0xc8] sm:$0x7f] %vm1461, %v1454
        %1487 = vst.msk [vmem:[%s225 + $0xd0] sm:$0xff] %vm1459, %v1455
        %1488 = vst.msk [vmem:[%s225 + $0xd8] sm:$0x7f] %vm1461, %v1456
        %1489 = vst.msk [vmem:[%s225 + $0xe0] sm:$0xff] %vm1459, %v1457
        %1490 = vst.msk [vmem:[%s225 + $0xe8] sm:$0x7f] %vm1461, %v1458
        %s1491 = sand.u32 %s108, 1
        %s1492 = sand.u32 %s108, 1
        %s1493 = smul.addr %s1492, 240
        %s1494 = scalar_lea.vmem [#allocation7], %s1493
        // Predicated region
        $region45: #{tpu_custom_call.1} parent=31 // pred_check
          %p1495 = pneg %p118
        $region46: #{tpu_custom_call.1} parent=31 // pred_check_branch
          %1497 = sbr.rel (%p1495) target = $region48
        $region47: #{tpu_custom_call.1} parent=31 // pred_region
          %s1498 = smul.addr %s23, 2
          %s1499 = smul.addr %s22, 60
          %s1500 = sadd.s32 %s1498, %s1499
          %s1501 = smul.addr %s1500, 8
          %s1502 = scalar_lea.vmem %s3, %s1501
          // Predicated region
          $region49: #{tpu_custom_call.1} parent=47 // pred_check
            _
          $region50: #{tpu_custom_call.1} parent=47 // pred_check_branch
            %1504 = sbr.rel (0) target = $region52
          $region51: #{tpu_custom_call.1} parent=47 // pred_region
            // Predicated region
            $region53: #{tpu_custom_call.1} parent=51 // pred_check
              _
            $region54: #{tpu_custom_call.1} parent=51 // pred_check_branch
              %1506 = sbr.rel (0) target = $region56
            $region55: #{tpu_custom_call.1} parent=51 // pred_region
              // Predicated region
              $region68: #{tpu_custom_call.1} parent=55 // pred_check
                _
              $region69: #{tpu_custom_call.1} parent=55 // pred_check_branch
                %1579 = sbr.rel (0) target = $region71
              $region70: #{tpu_custom_call.1} parent=55 // pred_region
                loop: start=0, step=1, limit=1
                $region72: #{tpu_custom_call.1} parent=70 // loop_pre_header
                  _
                $region73: #{tpu_custom_call.1} parent=70 // loop_header
                  %s1581 = sphi 0, %s1585
                  %p1582 = scmp.ge.s32.totalorder %s1581, 1
                  %s1586 = sphi %s1494, %s1494
                  %s1587 = sphi %s1502, %s1502
                $region74: #{tpu_custom_call.1} parent=70 // loop_header_branch
                  %1584 = sbr.rel (%p1582) target = $region78
                $region75: #{tpu_custom_call.1} parent=70 // loop_body
                  %v1588 = vld [vmem:[%s1586] sm:$0xff]
                  %1589 = vst [vmem:[%s1587] sm:$0xff] %v1588
                  %v1590 = vld [vmem:[%s1586 + $0x8] sm:$0xff]
                  %1591 = vst [vmem:[%s1587 + $0x8] sm:$0xff] %v1590
                  %v1592 = vld [vmem:[%s1586 + $0x10] sm:$0xff]
                  %1593 = vst [vmem:[%s1587 + $0x20] sm:$0xff] %v1592
                  %v1594 = vld [vmem:[%s1586 + $0x18] sm:$0xff]
                  %1595 = vst [vmem:[%s1587 + $0x28] sm:$0xff] %v1594
                  %v1596 = vld [vmem:[%s1586 + $0x20] sm:$0xff]
                  %1597 = vst [vmem:[%s1587 + $0x40] sm:$0xff] %v1596
                  %v1598 = vld [vmem:[%s1586 + $0x28] sm:$0xff]
                  %1599 = vst [vmem:[%s1587 + $0x48] sm:$0xff] %v1598
                  %v1600 = vld [vmem:[%s1586 + $0x30] sm:$0xff]
                  %1601 = vst [vmem:[%s1587 + $0x60] sm:$0xff] %v1600
                  %v1602 = vld [vmem:[%s1586 + $0x38] sm:$0xff]
                  %1603 = vst [vmem:[%s1587 + $0x68] sm:$0xff] %v1602
                  %v1604 = vld [vmem:[%s1586 + $0x40] sm:$0xff]
                  %1605 = vst [vmem:[%s1587 + $0x80] sm:$0xff] %v1604
                  %v1606 = vld [vmem:[%s1586 + $0x48] sm:$0xff]
                  %1607 = vst [vmem:[%s1587 + $0x88] sm:$0xff] %v1606
                  %v1608 = vld [vmem:[%s1586 + $0x50] sm:$0xff]
                  %1609 = vst [vmem:[%s1587 + $0xa0] sm:$0xff] %v1608
                  %v1610 = vld [vmem:[%s1586 + $0x58] sm:$0xff]
                  %1611 = vst [vmem:[%s1587 + $0xa8] sm:$0xff] %v1610
                  %v1612 = vld [vmem:[%s1586 + $0x60] sm:$0xff]
                  %1613 = vst [vmem:[%s1587 + $0xc0] sm:$0xff] %v1612
                  %v1614 = vld [vmem:[%s1586 + $0x68] sm:$0xff]
                  %1615 = vst [vmem:[%s1587 + $0xc8] sm:$0xff] %v1614
                  %v1616 = vld [vmem:[%s1586 + $0x70] sm:$0xff]
                  %1617 = vst [vmem:[%s1587 + $0xe0] sm:$0xff] %v1616
                  %v1618 = vld [vmem:[%s1586 + $0x78] sm:$0xff]
                  %1619 = vst [vmem:[%s1587 + $0xe8] sm:$0xff] %v1618
                  %v1620 = vld [vmem:[%s1586 + $0x80] sm:$0xff]
                  %1621 = vst [vmem:[%s1587 + $0x100] sm:$0xff] %v1620
                  %v1622 = vld [vmem:[%s1586 + $0x88] sm:$0xff]
                  %1623 = vst [vmem:[%s1587 + $0x108] sm:$0xff] %v1622
                  %v1624 = vld [vmem:[%s1586 + $0x90] sm:$0xff]
                  %1625 = vst [vmem:[%s1587 + $0x120] sm:$0xff] %v1624
                  %v1626 = vld [vmem:[%s1586 + $0x98] sm:$0xff]
                  %1627 = vst [vmem:[%s1587 + $0x128] sm:$0xff] %v1626
                  %v1628 = vld [vmem:[%s1586 + $0xa0] sm:$0xff]
                  %1629 = vst [vmem:[%s1587 + $0x140] sm:$0xff] %v1628
                  %v1630 = vld [vmem:[%s1586 + $0xa8] sm:$0xff]
                  %1631 = vst [vmem:[%s1587 + $0x148] sm:$0xff] %v1630
                  %v1632 = vld [vmem:[%s1586 + $0xb0] sm:$0xff]
                  %1633 = vst [vmem:[%s1587 + $0x160] sm:$0xff] %v1632
                  %v1634 = vld [vmem:[%s1586 + $0xb8] sm:$0xff]
                  %1635 = vst [vmem:[%s1587 + $0x168] sm:$0xff] %v1634
                  %v1636 = vld [vmem:[%s1586 + $0xc0] sm:$0xff]
                  %1637 = vst [vmem:[%s1587 + $0x180] sm:$0xff] %v1636
                  %v1638 = vld [vmem:[%s1586 + $0xc8] sm:$0xff]
                  %1639 = vst [vmem:[%s1587 + $0x188] sm:$0xff] %v1638
                  %v1640 = vld [vmem:[%s1586 + $0xd0] sm:$0xff]
                  %1641 = vst [vmem:[%s1587 + $0x1a0] sm:$0xff] %v1640
                  %v1642 = vld [vmem:[%s1586 + $0xd8] sm:$0xff]
                  %1643 = vst [vmem:[%s1587 + $0x1a8] sm:$0xff] %v1642
                  %v1644 = vld [vmem:[%s1586 + $0xe0] sm:$0xff]
                  %1645 = vst [vmem:[%s1587 + $0x1c0] sm:$0xff] %v1644
                  %v1646 = vld [vmem:[%s1586 + $0xe8] sm:$0xff]
                  %1647 = vst [vmem:[%s1587 + $0x1c8] sm:$0xff] %v1646
                $region76: #{tpu_custom_call.1} parent=70 // loop_footer
                  %s1585 = sadd.s32 1, %s1581
                $region77: #{tpu_custom_call.1} parent=70 // loop_footer_branch
                  %1580 = sbr.rel target = $region73
                $region78: #{tpu_custom_call.1} parent=70 // loop_exit
                  _
              $region71: #{tpu_custom_call.1} parent=55 // pred_fallthru
                _
              // Predicated region
              $region79: #{tpu_custom_call.1} parent=55 // pred_check
                _
              $region80: #{tpu_custom_call.1} parent=55 // pred_check_branch
                %1649 = sbr.rel target = $region82
              $region81: #{tpu_custom_call.1} parent=55 // pred_region
                _
              $region82: #{tpu_custom_call.1} parent=55 // pred_fallthru
                _
            $region56: #{tpu_custom_call.1} parent=51 // pred_fallthru
              _
            // Predicated region
            $region57: #{tpu_custom_call.1} parent=51 // pred_check
              _
            $region58: #{tpu_custom_call.1} parent=51 // pred_check_branch
              %1508 = sbr.rel target = $region60
            $region59: #{tpu_custom_call.1} parent=51 // pred_region
              loop: start=0, step=1, limit=1
              $region61: #{tpu_custom_call.1} parent=59 // loop_pre_header
                _
              $region62: #{tpu_custom_call.1} parent=59 // loop_header
                %s1511 = sphi 0, %s1515
                %p1512 = scmp.ge.s32.totalorder %s1511, 1
                %s1516 = sphi %s1494, %s1494
                %s1517 = sphi %s1502, %s1502
              $region63: #{tpu_custom_call.1} parent=59 // loop_header_branch
                %1514 = sbr.rel (%p1512) target = $region67
              $region64: #{tpu_custom_call.1} parent=59 // loop_body
                %v1518 = vld [vmem:[%s1516] sm:$0xff]
                %1519 = vst [vmem:[%s1517] sm:$0xff] %v1518
                %v1520 = vld [vmem:[%s1516 + $0x8] sm:$0xff]
                %1521 = vst [vmem:[%s1517 + $0x8] sm:$0xff] %v1520
                %v1522 = vld [vmem:[%s1516 + $0x10] sm:$0xff]
                %1523 = vst [vmem:[%s1517 + $0x20] sm:$0xff] %v1522
                %v1524 = vld [vmem:[%s1516 + $0x18] sm:$0xff]
                %1525 = vst [vmem:[%s1517 + $0x28] sm:$0xff] %v1524
                %v1526 = vld [vmem:[%s1516 + $0x20] sm:$0xff]
                %1527 = vst [vmem:[%s1517 + $0x40] sm:$0xff] %v1526
                %v1528 = vld [vmem:[%s1516 + $0x28] sm:$0xff]
                %1529 = vst [vmem:[%s1517 + $0x48] sm:$0xff] %v1528
                %v1530 = vld [vmem:[%s1516 + $0x30] sm:$0xff]
                %1531 = vst [vmem:[%s1517 + $0x60] sm:$0xff] %v1530
                %v1532 = vld [vmem:[%s1516 + $0x38] sm:$0xff]
                %1533 = vst [vmem:[%s1517 + $0x68] sm:$0xff] %v1532
                %v1534 = vld [vmem:[%s1516 + $0x40] sm:$0xff]
                %1535 = vst [vmem:[%s1517 + $0x80] sm:$0xff] %v1534
                %v1536 = vld [vmem:[%s1516 + $0x48] sm:$0xff]
                %1537 = vst [vmem:[%s1517 + $0x88] sm:$0xff] %v1536
                %v1538 = vld [vmem:[%s1516 + $0x50] sm:$0xff]
                %1539 = vst [vmem:[%s1517 + $0xa0] sm:$0xff] %v1538
                %v1540 = vld [vmem:[%s1516 + $0x58] sm:$0xff]
                %1541 = vst [vmem:[%s1517 + $0xa8] sm:$0xff] %v1540
                %v1542 = vld [vmem:[%s1516 + $0x60] sm:$0xff]
                %1543 = vst [vmem:[%s1517 + $0xc0] sm:$0xff] %v1542
                %v1544 = vld [vmem:[%s1516 + $0x68] sm:$0xff]
                %1545 = vst [vmem:[%s1517 + $0xc8] sm:$0xff] %v1544
                %v1546 = vld [vmem:[%s1516 + $0x70] sm:$0xff]
                %1547 = vst [vmem:[%s1517 + $0xe0] sm:$0xff] %v1546
                %v1548 = vld [vmem:[%s1516 + $0x78] sm:$0xff]
                %1549 = vst [vmem:[%s1517 + $0xe8] sm:$0xff] %v1548
                %v1550 = vld [vmem:[%s1516 + $0x80] sm:$0xff]
                %1551 = vst [vmem:[%s1517 + $0x100] sm:$0xff] %v1550
                %v1552 = vld [vmem:[%s1516 + $0x88] sm:$0xff]
                %1553 = vst [vmem:[%s1517 + $0x108] sm:$0xff] %v1552
                %v1554 = vld [vmem:[%s1516 + $0x90] sm:$0xff]
                %1555 = vst [vmem:[%s1517 + $0x120] sm:$0xff] %v1554
                %v1556 = vld [vmem:[%s1516 + $0x98] sm:$0xff]
                %1557 = vst [vmem:[%s1517 + $0x128] sm:$0xff] %v1556
                %v1558 = vld [vmem:[%s1516 + $0xa0] sm:$0xff]
                %1559 = vst [vmem:[%s1517 + $0x140] sm:$0xff] %v1558
                %v1560 = vld [vmem:[%s1516 + $0xa8] sm:$0xff]
                %1561 = vst [vmem:[%s1517 + $0x148] sm:$0xff] %v1560
                %v1562 = vld [vmem:[%s1516 + $0xb0] sm:$0xff]
                %1563 = vst [vmem:[%s1517 + $0x160] sm:$0xff] %v1562
                %v1564 = vld [vmem:[%s1516 + $0xb8] sm:$0xff]
                %1565 = vst [vmem:[%s1517 + $0x168] sm:$0xff] %v1564
                %v1566 = vld [vmem:[%s1516 + $0xc0] sm:$0xff]
                %1567 = vst [vmem:[%s1517 + $0x180] sm:$0xff] %v1566
                %v1568 = vld [vmem:[%s1516 + $0xc8] sm:$0xff]
                %1569 = vst [vmem:[%s1517 + $0x188] sm:$0xff] %v1568
                %v1570 = vld [vmem:[%s1516 + $0xd0] sm:$0xff]
                %1571 = vst [vmem:[%s1517 + $0x1a0] sm:$0xff] %v1570
                %v1572 = vld [vmem:[%s1516 + $0xd8] sm:$0xff]
                %1573 = vst [vmem:[%s1517 + $0x1a8] sm:$0xff] %v1572
                %v1574 = vld [vmem:[%s1516 + $0xe0] sm:$0xff]
                %1575 = vst [vmem:[%s1517 + $0x1c0] sm:$0xff] %v1574
                %v1576 = vld [vmem:[%s1516 + $0xe8] sm:$0xff]
                %1577 = vst [vmem:[%s1517 + $0x1c8] sm:$0xff] %v1576
              $region65: #{tpu_custom_call.1} parent=59 // loop_footer
                %s1515 = sadd.s32 1, %s1511
              $region66: #{tpu_custom_call.1} parent=59 // loop_footer_branch
                %1510 = sbr.rel target = $region62
              $region67: #{tpu_custom_call.1} parent=59 // loop_exit
                _
            $region60: #{tpu_custom_call.1} parent=51 // pred_fallthru
              _
          $region52: #{tpu_custom_call.1} parent=47 // pred_fallthru
            _
          %1650 = vnop
        $region48: #{tpu_custom_call.1} parent=31 // pred_fallthru
          _
      $region32: #{tpu_custom_call.1} parent=5 // pred_fallthru
        _
      %p1651 = scmp.le.s32.totalorder 2, %s13
      // Predicated region
      $region83: #{tpu_custom_call.1} parent=5 // pred_check
        %p1652 = pneg %p1651
      $region84: #{tpu_custom_call.1} parent=5 // pred_check_branch
        %1654 = sbr.rel (%p1652) target = $region86
      $region85: #{tpu_custom_call.1} parent=5 // pred_region
        %s1655 = ssub.s32 %s13, 2
        // Predicated region
        $region87: #{tpu_custom_call.1} parent=85 // pred_check
          %p1656 = pneg %p124
        $region88: #{tpu_custom_call.1} parent=85 // pred_check_branch
          %1658 = sbr.rel (%p1656) target = $region90
        $region89: #{tpu_custom_call.1} parent=85 // pred_region
          %s1659 = sand.u32 %s109, 1
          %s1660 = sand.u32 %s109, 1
          %s1661 = smul.addr %s1660, 240
          %s1662 = scalar_lea.vmem [#allocation7], %s1661
        $region90: #{tpu_custom_call.1} parent=85 // pred_fallthru
          _
      $region86: #{tpu_custom_call.1} parent=5 // pred_fallthru
        _
    $region6: #{tpu_custom_call.1} parent=1 // loop_footer
      %s17 = sadd.s32 1, %s13
    $region7: #{tpu_custom_call.1} parent=1 // loop_footer_branch
      %12 = sbr.rel target = $region3
    $region8: #{tpu_custom_call.1} parent=1 // loop_exit
      _
    %1663 = vsyncpa [#allocation3], 1
    %s1664 = scalar_lea.sflag [#allocation3], 1
    %1665 = vsyncpa %s1664, 1
    %1666 = vsyncpa [#allocation5], 1

</llo_original>
